<compile_context>
chip_gen: v7x
topology: tpu7x:2x2x1
jax: 0.10.0
libtpu: 0.0.40
codegen_flags: <defaults>
</compile_context>

<pallas_src>
import functools

import numpy as np

import jax
import jax.numpy as jnp
from jax import lax
from jax.experimental import pallas as pl
from jax.experimental.pallas import tpu as pltpu

_BN_EPS = 1e-3


# ----------------------------- fused MBConv kernel ---------------------------

def _mbconv_kernel(*refs, shifts, has_expand, has_se, has_residual, downsample):
    """One full MBConv layer for one sample, entirely in VMEM.

    Activation layout is (C, H*W): channels on sublanes, flattened spatial on
    the 128-lane axis (lane-dense stores, MXU-friendly matmuls).
    """
    it = iter(refs)
    x_ref = next(it)                       # (1, c_in, hw)
    mask_ref = next(it)                    # (k*k, 1, hw)  0/1 tap validity
    if has_expand:
        ew_ref = next(it)                  # (c_mid, c_in)
        es_ref = next(it)                  # (c_mid, 1) folded-BN scale
        eb_ref = next(it)                  # (c_mid, 1) folded-BN bias
    dw_ref = next(it)                      # (k*k, c_mid, 1) depthwise weights
    ds_ref = next(it)                      # (c_mid, 1)
    db_ref = next(it)                      # (c_mid, 1)
    if has_se:
        w1_ref = next(it)                  # (c_mid, sq)
        b1_ref = next(it)                  # (1, sq)
        w2_ref = next(it)                  # (c_mid, sq)
        b2_ref = next(it)                  # (c_mid, 1)
    pw_ref = next(it)                      # (c_out, c_mid)
    ps_ref = next(it)                      # (c_out, 1)
    pb_ref = next(it)                      # (c_out, 1)
    sel_ref = next(it) if downsample else None   # (hw, oh*ow)
    o_ref = next(it)                       # (1, c_out, oh*ow)

    x = x_ref[0]                                            # (c_in, hw)

    # ---- expand 1x1 conv + folded BN + Swish (MXU: spatial fills the lanes) --
    if has_expand:
        h = jnp.dot(ew_ref[...], x, preferred_element_type=jnp.float32)
        h = h * es_ref[...] + eb_ref[...]
        h = h * jax.nn.sigmoid(h)
    else:
        h = x                                               # (c_mid, hw)

    # ---- depthwise conv: sum of k*k lane-rolled, masked taps (XLU + VPU) ----
    w_taps = dw_ref[...]                                    # hoisted (k*k,c_mid,1)
    m_taps = mask_ref[...]                                  # hoisted (k*k,1,hw)
    acc = None
    for t, s in enumerate(shifts):
        shifted = pltpu.roll(h, s, 1) if s else h
        term = shifted * w_taps[t] * m_taps[t]
        acc = term if acc is None else acc + term
    y = acc * ds_ref[...] + db_ref[...]
    y = y * jax.nn.sigmoid(y)                               # (c_mid, hw)

    # ---- stride > 1: compact stride-1 grid to the strided output grid -------
    if downsample:
        y = jnp.dot(y, sel_ref[...], preferred_element_type=jnp.float32)

    # ---- squeeze-and-excitation (tiny FCs on VPU, gate fused in place) ------
    if has_se:
        pooled = jnp.sum(y, axis=1, keepdims=True) * (1.0 / y.shape[1])   # (c_mid,1)
        z = jnp.sum(w1_ref[...] * pooled, axis=0, keepdims=True) + b1_ref[...]
        z = z * jax.nn.sigmoid(z)                                         # (1, sq)
        g = jnp.sum(w2_ref[...] * z, axis=1, keepdims=True) + b2_ref[...]
        y = y * jax.nn.sigmoid(g)                                         # gate

    # ---- project 1x1 conv + folded BN (+ residual) ---------------------------
    out = jnp.dot(pw_ref[...], y, preferred_element_type=jnp.float32)
    out = out * ps_ref[...] + pb_ref[...]
    if has_residual:
        out = out + x
    o_ref[0] = out.astype(o_ref.dtype)


# --------------------------- static depthwise constants ----------------------

def _dw_constants(h, w, k, stride):
    """Lane-shift / validity-mask (and stride>1 selection) constants for the
    TF-'same' depthwise conv evaluated on the flattened (H*W) lane axis."""
    oh = -(-h // stride)
    ow = -(-w // stride)
    pad_h = max(0, (oh - 1) * stride + k - h)
    pad_w = max(0, (ow - 1) * stride + k - w)
    pad_t, pad_l = pad_h // 2, pad_w // 2
    hw = h * w
    rows = np.arange(hw) // w
    cols = np.arange(hw) % w
    shifts, masks = [], []
    for di in range(k):
        for dj in range(k):
            off = (di - pad_t) * w + (dj - pad_l)
            shifts.append(int((-off) % hw))
            src_r = rows + di - pad_t
            src_c = cols + dj - pad_l
            valid = (src_r >= 0) & (src_r < h) & (src_c >= 0) & (src_c < w)
            masks.append(valid.astype(np.float32))
    masks = np.stack(masks)[:, None, :]                     # (k*k, 1, hw)
    sel = None
    if stride > 1:
        sel = np.zeros((hw, oh * ow), np.float32)
        for io in range(oh):
            for jo in range(ow):
                sel[io * stride * w + jo * stride, io * ow + jo] = 1.0
    return tuple(shifts), masks, sel, oh, ow


# ------------------------------ layer / block wrappers -----------------------

def _fold_bn(bn):
    gamma, beta, mean, var = bn
    scale = gamma / jnp.sqrt(var + _BN_EPS)
    return scale, beta - mean * scale


def mbconv_forward(x_flat, p, *, c_in, c_out, h, w, k, stride, skip, expand,
                   se_ratio):
    """One MBConv layer on the persistent (N, C, H*W) activation layout."""
    n = x_flat.shape[0]
    hw = h * w
    c_mid = c_in * expand
    has_expand = expand != 1
    has_se = se_ratio > 0
    use_skip = skip and stride == 1 and c_in == c_out
    shifts, masks, sel, oh, ow = _dw_constants(h, w, k, stride)
    ohw = oh * ow

    args = [x_flat]
    in_specs = [pl.BlockSpec((1, c_in, hw), lambda i: (i, 0, 0))]

    def add_const(a):
        a = jnp.asarray(a, jnp.float32)
        args.append(a)
        in_specs.append(
            pl.BlockSpec(a.shape, lambda i, _nd=a.ndim: (0,) * _nd))

    add_const(masks)
    if has_expand:
        s_e, b_e = _fold_bn(p["expand_bn"])
        add_const(p["expand_w"])                    # (c_mid, c_in)
        add_const(s_e[:, None])
        add_const(b_e[:, None])
    s_d, b_d = _fold_bn(p["dw_bn"])
    add_const(p["dw_w"].reshape(k * k, c_mid)[:, :, None])
    add_const(s_d[:, None])
    add_const(b_d[:, None])
    if has_se:
        add_const(p["se_w1"].T)                     # (c_mid, sq)
        add_const(p["se_b1"][None, :])              # (1, sq)
        add_const(p["se_w2"])                       # (c_mid, sq)
        add_const(p["se_b2"][:, None])              # (c_mid, 1)
    s_p, b_p = _fold_bn(p["proj_bn"])
    add_const(p["proj_w"])                          # (c_out, c_mid)
    add_const(s_p[:, None])
    add_const(b_p[:, None])
    if stride > 1:
        add_const(sel)

    kernel = functools.partial(
        _mbconv_kernel, shifts=shifts, has_expand=has_expand, has_se=has_se,
        has_residual=use_skip, downsample=stride > 1)

    out = pl.pallas_call(
        kernel,
        out_shape=jax.ShapeDtypeStruct((n, c_out, ohw), x_flat.dtype),
        grid=(n,),
        in_specs=in_specs,
        out_specs=pl.BlockSpec((1, c_out, ohw), lambda i: (i, 0, 0)),
        compiler_params=pltpu.CompilerParams(
            dimension_semantics=("parallel",)),
    )(*args)
    return out, oh, ow


def mbblock_forward(x_nchw, layer_params, *, in_c, out_c, expand, k, stride,
                    skip, se_ratio):
    n, c, h, w = x_nchw.shape
    x = x_nchw.reshape(n, c, h * w)                 # free row-major reshape
    for i, p in enumerate(layer_params):
        x, h, w = mbconv_forward(
            x, p,
            c_in=in_c if i == 0 else out_c, c_out=out_c, h=h, w=w, k=k,
            stride=stride if i == 0 else 1, skip=skip, expand=expand,
            se_ratio=se_ratio)
    return x.reshape(n, out_c, h, w)


# ------------------------- parameters & pure-JAX reference -------------------

def _bn_init(key, ch):
    k1, k2, k3, k4 = jax.random.split(key, 4)
    gamma = jax.random.uniform(k1, (ch,), minval=0.5, maxval=1.5)
    beta = jax.random.normal(k2, (ch,)) * 0.1
    mean = jax.random.normal(k3, (ch,)) * 0.1
    var = jax.random.uniform(k4, (ch,), minval=0.5, maxval=1.5)
    return gamma, beta, mean, var


def init_mbconv_params(key, in_c, out_c, expand, k, se_ratio):
    mid = in_c * expand
    sq = int(in_c * se_ratio)
    keys = jax.random.split(key, 10)
    p = {}
    if expand != 1:
        p["expand_w"] = jax.random.normal(keys[0], (mid, in_c)) * 0.3
        p["expand_bn"] = _bn_init(keys[1], mid)
    p["dw_w"] = jax.random.normal(keys[2], (k, k, mid)) * 0.3
    p["dw_bn"] = _bn_init(keys[3], mid)
    if se_ratio > 0:
        p["se_w1"] = jax.random.normal(keys[4], (sq, mid)) * 0.3
        p["se_b1"] = jax.random.normal(keys[5], (sq,)) * 0.1
        p["se_w2"] = jax.random.normal(keys[6], (mid, sq)) * 0.3
        p["se_b2"] = jax.random.normal(keys[7], (mid,)) * 0.1
    p["proj_w"] = jax.random.normal(keys[8], (out_c, mid)) * 0.3
    p["proj_bn"] = _bn_init(keys[9], out_c)
    return p


def _swish(x):
    return x * jax.nn.sigmoid(x)


def _bn_ref(x, bn):
    gamma, beta, mean, var = bn
    inv = gamma / jnp.sqrt(var + _BN_EPS)
    return x * inv[None, :, None, None] + (beta - mean * inv)[None, :, None, None]


def mbconv_ref(x, p, *, c_in, c_out, expand, k, stride, skip, se_ratio):
    inputs = x
    if expand != 1:
        x = _swish(_bn_ref(jnp.einsum("oc,nchw->nohw", p["expand_w"], x),
                           p["expand_bn"]))
    c_mid = x.shape[1]
    rhs = jnp.transpose(p["dw_w"], (2, 0, 1))[:, None, :, :]    # (c_mid,1,k,k)
    x = lax.conv_general_dilated(
        x, rhs, (stride, stride), "SAME",
        dimension_numbers=("NCHW", "OIHW", "NCHW"), feature_group_count=c_mid)
    x = _swish(_bn_ref(x, p["dw_bn"]))
    if se_ratio > 0:
        pooled = jnp.mean(x, axis=(2, 3))                       # (n, c_mid)
        hdn = _swish(pooled @ p["se_w1"].T + p["se_b1"])
        gate = jax.nn.sigmoid(hdn @ p["se_w2"].T + p["se_b2"])
        x = x * gate[:, :, None, None]
    x = _bn_ref(jnp.einsum("oc,nchw->nohw", p["proj_w"], x), p["proj_bn"])
    if skip and stride == 1 and c_in == c_out:
        x = x + inputs
    return x


def mbblock_ref(x, layer_params, *, in_c, out_c, expand, k, stride, skip,
                se_ratio):
    for i, p in enumerate(layer_params):
        x = mbconv_ref(x, p, c_in=in_c if i == 0 else out_c, c_out=out_c,
                       expand=expand, k=k, stride=stride if i == 0 else 1,
                       skip=skip, se_ratio=se_ratio)
    return x


# ----------------------------------- main ------------------------------------

def _run_block(key, *, batch, in_c, out_c, expand, kernel, stride, num_repeat,
               skip, se_ratio, h, w):
    key, xkey = jax.random.split(key)
    x = jax.random.normal(xkey, (batch, in_c, h, w), dtype=jnp.float32)  # NCHW
    layer_params = []
    for i in range(num_repeat):
        key, sub = jax.random.split(key)
        layer_in = in_c if i == 0 else out_c
        layer_params.append(
            init_mbconv_params(sub, layer_in, out_c, expand, kernel, se_ratio))

    fwd = jax.jit(functools.partial(
        mbblock_forward, in_c=in_c, out_c=out_c, expand=expand, k=kernel,
        stride=stride, skip=skip, se_ratio=se_ratio))
    out = jax.block_until_ready(fwd(x, layer_params))

    ref = mbblock_ref(x, layer_params, in_c=in_c, out_c=out_c, expand=expand,
                      k=kernel, stride=stride, skip=skip, se_ratio=se_ratio)
    np.testing.assert_allclose(np.asarray(out), np.asarray(ref),
                               rtol=1e-3, atol=1e-3)


if __name__ == "__main__":
    key = jax.random.PRNGKey(0)
    k1, k2 = jax.random.split(key)

    # MBBlock(in_=8, out_=8, expand=2, kernel=3, stride=1, num_repeat=2,
    #         skip=True, se_ratio=0.25) on a (2, 8, 16, 16) NCHW input.
    _run_block(k1, batch=2, in_c=8, out_c=8, expand=2, kernel=3, stride=1,
               num_repeat=2, skip=True, se_ratio=0.25, h=16, w=16)

    # Strided / channel-changing variant: MBBlock(8, 16, expand=2, kernel=3,
    # stride=2, num_repeat=2, skip=True, se_ratio=0.25) on (2, 8, 32, 32),
    # exercising the in-kernel downsample and the no-residual path.
    _run_block(k2, batch=2, in_c=8, out_c=16, expand=2, kernel=3, stride=2,
               num_repeat=2, skip=True, se_ratio=0.25, h=32, w=32)

    print("KERNEL_OK")
</pallas_src>

<mosaic_0001>
module attributes {stable_mosaic.version = 11 : i64} {
  func.func @_mbconv_kernel(%arg0: i32, %arg1: memref<1x8x256xf32, #tpu.memory_space<vmem>>, %arg2: memref<9x1x256xf32, #tpu.memory_space<vmem>>, %arg3: memref<16x8xf32, #tpu.memory_space<vmem>>, %arg4: memref<16x1xf32, #tpu.memory_space<vmem>>, %arg5: memref<16x1xf32, #tpu.memory_space<vmem>>, %arg6: memref<9x16x1xf32, #tpu.memory_space<vmem>>, %arg7: memref<16x1xf32, #tpu.memory_space<vmem>>, %arg8: memref<16x1xf32, #tpu.memory_space<vmem>>, %arg9: memref<16x2xf32, #tpu.memory_space<vmem>>, %arg10: memref<1x2xf32, #tpu.memory_space<vmem>>, %arg11: memref<16x2xf32, #tpu.memory_space<vmem>>, %arg12: memref<16x1xf32, #tpu.memory_space<vmem>>, %arg13: memref<8x16xf32, #tpu.memory_space<vmem>>, %arg14: memref<8x1xf32, #tpu.memory_space<vmem>>, %arg15: memref<8x1xf32, #tpu.memory_space<vmem>>, %arg16: memref<1x8x256xf32, #tpu.memory_space<vmem>>) attributes {dimension_semantics = [#tpu.dimension_semantics<parallel>], iteration_bounds = array<i64: 2>, scalar_prefetch = 0 : i64, scratch_operands = 0 : i64, tpu.core_type = #tpu.core_type<tc>, window_params = [{transform_indices = @transform_0, window_bounds = array<i64: 1, 8, 256>}, {pipeline_mode = #tpu.pipeline_mode<synchronous>, transform_indices = @transform_1, window_bounds = array<i64: 9, 1, 256>}, {pipeline_mode = #tpu.pipeline_mode<synchronous>, transform_indices = @transform_2, window_bounds = array<i64: 16, 8>}, {pipeline_mode = #tpu.pipeline_mode<synchronous>, transform_indices = @transform_3, window_bounds = array<i64: 16, 1>}, {pipeline_mode = #tpu.pipeline_mode<synchronous>, transform_indices = @transform_4, window_bounds = array<i64: 16, 1>}, {pipeline_mode = #tpu.pipeline_mode<synchronous>, transform_indices = @transform_5, window_bounds = array<i64: 9, 16, 1>}, {pipeline_mode = #tpu.pipeline_mode<synchronous>, transform_indices = @transform_6, window_bounds = array<i64: 16, 1>}, {pipeline_mode = #tpu.pipeline_mode<synchronous>, transform_indices = @transform_7, window_bounds = array<i64: 16, 1>}, {pipeline_mode = #tpu.pipeline_mode<synchronous>, transform_indices = @transform_8, window_bounds = array<i64: 16, 2>}, {pipeline_mode = #tpu.pipeline_mode<synchronous>, transform_indices = @transform_9, window_bounds = array<i64: 1, 2>}, {pipeline_mode = #tpu.pipeline_mode<synchronous>, transform_indices = @transform_10, window_bounds = array<i64: 16, 2>}, {pipeline_mode = #tpu.pipeline_mode<synchronous>, transform_indices = @transform_11, window_bounds = array<i64: 16, 1>}, {pipeline_mode = #tpu.pipeline_mode<synchronous>, transform_indices = @transform_12, window_bounds = array<i64: 8, 16>}, {pipeline_mode = #tpu.pipeline_mode<synchronous>, transform_indices = @transform_13, window_bounds = array<i64: 8, 1>}, {pipeline_mode = #tpu.pipeline_mode<synchronous>, transform_indices = @transform_14, window_bounds = array<i64: 8, 1>}, {transform_indices = @transform_15, window_bounds = array<i64: 1, 8, 256>}]} {
    %c0 = arith.constant 0 : index
    %c0_0 = arith.constant 0 : index
    %c0_1 = arith.constant 0 : index
    %0 = vector.load %arg1[%c0, %c0_0, %c0_1] : memref<1x8x256xf32, #tpu.memory_space<vmem>>, vector<1x8x256xf32>
    %1 = vector.shape_cast %0 : vector<1x8x256xf32> to vector<8x256xf32>
    %c0_2 = arith.constant 0 : index
    %c0_3 = arith.constant 0 : index
    %2 = vector.load %arg3[%c0_2, %c0_3] : memref<16x8xf32, #tpu.memory_space<vmem>>, vector<16x8xf32>
    %cst = arith.constant dense<0.000000e+00> : vector<16x256xf32>
    %3 = tpu.matmul %2, %1, %cst {dimension_numbers = #tpu.dot_dimension_numbers<[1], [0], [0], [1], [0, 0, 1, 1], [], []>} : vector<16x8xf32>, vector<8x256xf32>, vector<16x256xf32> -> vector<16x256xf32>
    %c0_4 = arith.constant 0 : index
    %c0_5 = arith.constant 0 : index
    %4 = vector.load %arg4[%c0_4, %c0_5] : memref<16x1xf32, #tpu.memory_space<vmem>>, vector<16x1xf32>
    %5 = vector.broadcast %4 : vector<16x1xf32> to vector<16x256xf32>
    %6 = arith.mulf %3, %5 : vector<16x256xf32>
    %c0_6 = arith.constant 0 : index
    %c0_7 = arith.constant 0 : index
    %7 = vector.load %arg5[%c0_6, %c0_7] : memref<16x1xf32, #tpu.memory_space<vmem>>, vector<16x1xf32>
    %8 = vector.broadcast %7 : vector<16x1xf32> to vector<16x256xf32>
    %9 = arith.addf %6, %8 : vector<16x256xf32>
    %10 = arith.negf %9 : vector<16x256xf32>
    %11 = math.exp %10 : vector<16x256xf32>
    %cst_8 = arith.constant 1.000000e+00 : f32
    %12 = vector.broadcast %cst_8 : f32 to vector<16x256xf32>
    %13 = arith.addf %12, %11 : vector<16x256xf32>
    %14 = arith.divf %12, %13 : vector<16x256xf32>
    %15 = arith.mulf %9, %14 : vector<16x256xf32>
    %c0_9 = arith.constant 0 : index
    %c0_10 = arith.constant 0 : index
    %c0_11 = arith.constant 0 : index
    %16 = vector.load %arg6[%c0_9, %c0_10, %c0_11] : memref<9x16x1xf32, #tpu.memory_space<vmem>>, vector<9x16x1xf32>
    %c0_12 = arith.constant 0 : index
    %c0_13 = arith.constant 0 : index
    %c0_14 = arith.constant 0 : index
    %17 = vector.load %arg2[%c0_12, %c0_13, %c0_14] : memref<9x1x256xf32, #tpu.memory_space<vmem>>, vector<9x1x256xf32>
    %c17_i32 = arith.constant 17 : i32
    %18 = tpu.dynamic_rotate %15 by %c17_i32 dim 1 : vector<16x256xf32>, i32 -> vector<16x256xf32>
    %19 = vector.extract_strided_slice %16 {offsets = [0, 0, 0], sizes = [1, 16, 1], strides = [1, 1, 1]} : vector<9x16x1xf32> to vector<1x16x1xf32>
    %20 = vector.shape_cast %19 : vector<1x16x1xf32> to vector<16x1xf32>
    %21 = vector.broadcast %20 : vector<16x1xf32> to vector<16x256xf32>
    %22 = arith.mulf %18, %21 : vector<16x256xf32>
    %23 = vector.extract_strided_slice %17 {offsets = [0, 0, 0], sizes = [1, 1, 256], strides = [1, 1, 1]} : vector<9x1x256xf32> to vector<1x1x256xf32>
    %24 = vector.shape_cast %23 : vector<1x1x256xf32> to vector<1x256xf32>
    %25 = vector.broadcast %24 : vector<1x256xf32> to vector<16x256xf32>
    %26 = arith.mulf %22, %25 : vector<16x256xf32>
    %c16_i32 = arith.constant 16 : i32
    %27 = tpu.dynamic_rotate %15 by %c16_i32 dim 1 : vector<16x256xf32>, i32 -> vector<16x256xf32>
    %28 = vector.extract_strided_slice %16 {offsets = [1, 0, 0], sizes = [1, 16, 1], strides = [1, 1, 1]} : vector<9x16x1xf32> to vector<1x16x1xf32>
    %29 = vector.shape_cast %28 : vector<1x16x1xf32> to vector<16x1xf32>
    %30 = vector.broadcast %29 : vector<16x1xf32> to vector<16x256xf32>
    %31 = arith.mulf %27, %30 : vector<16x256xf32>
    %32 = vector.extract_strided_slice %17 {offsets = [1, 0, 0], sizes = [1, 1, 256], strides = [1, 1, 1]} : vector<9x1x256xf32> to vector<1x1x256xf32>
    %33 = vector.shape_cast %32 : vector<1x1x256xf32> to vector<1x256xf32>
    %34 = vector.broadcast %33 : vector<1x256xf32> to vector<16x256xf32>
    %35 = arith.mulf %31, %34 : vector<16x256xf32>
    %36 = arith.addf %26, %35 : vector<16x256xf32>
    %c15_i32 = arith.constant 15 : i32
    %37 = tpu.dynamic_rotate %15 by %c15_i32 dim 1 : vector<16x256xf32>, i32 -> vector<16x256xf32>
    %38 = vector.extract_strided_slice %16 {offsets = [2, 0, 0], sizes = [1, 16, 1], strides = [1, 1, 1]} : vector<9x16x1xf32> to vector<1x16x1xf32>
    %39 = vector.shape_cast %38 : vector<1x16x1xf32> to vector<16x1xf32>
    %40 = vector.broadcast %39 : vector<16x1xf32> to vector<16x256xf32>
    %41 = arith.mulf %37, %40 : vector<16x256xf32>
    %42 = vector.extract_strided_slice %17 {offsets = [2, 0, 0], sizes = [1, 1, 256], strides = [1, 1, 1]} : vector<9x1x256xf32> to vector<1x1x256xf32>
    %43 = vector.shape_cast %42 : vector<1x1x256xf32> to vector<1x256xf32>
    %44 = vector.broadcast %43 : vector<1x256xf32> to vector<16x256xf32>
    %45 = arith.mulf %41, %44 : vector<16x256xf32>
    %46 = arith.addf %36, %45 : vector<16x256xf32>
    %c1_i32 = arith.constant 1 : i32
    %47 = tpu.dynamic_rotate %15 by %c1_i32 dim 1 : vector<16x256xf32>, i32 -> vector<16x256xf32>
    %48 = vector.extract_strided_slice %16 {offsets = [3, 0, 0], sizes = [1, 16, 1], strides = [1, 1, 1]} : vector<9x16x1xf32> to vector<1x16x1xf32>
    %49 = vector.shape_cast %48 : vector<1x16x1xf32> to vector<16x1xf32>
    %50 = vector.broadcast %49 : vector<16x1xf32> to vector<16x256xf32>
    %51 = arith.mulf %47, %50 : vector<16x256xf32>
    %52 = vector.extract_strided_slice %17 {offsets = [3, 0, 0], sizes = [1, 1, 256], strides = [1, 1, 1]} : vector<9x1x256xf32> to vector<1x1x256xf32>
    %53 = vector.shape_cast %52 : vector<1x1x256xf32> to vector<1x256xf32>
    %54 = vector.broadcast %53 : vector<1x256xf32> to vector<16x256xf32>
    %55 = arith.mulf %51, %54 : vector<16x256xf32>
    %56 = arith.addf %46, %55 : vector<16x256xf32>
    %57 = vector.extract_strided_slice %16 {offsets = [4, 0, 0], sizes = [1, 16, 1], strides = [1, 1, 1]} : vector<9x16x1xf32> to vector<1x16x1xf32>
    %58 = vector.shape_cast %57 : vector<1x16x1xf32> to vector<16x1xf32>
    %59 = vector.broadcast %58 : vector<16x1xf32> to vector<16x256xf32>
    %60 = arith.mulf %15, %59 : vector<16x256xf32>
    %61 = vector.extract_strided_slice %17 {offsets = [4, 0, 0], sizes = [1, 1, 256], strides = [1, 1, 1]} : vector<9x1x256xf32> to vector<1x1x256xf32>
    %62 = vector.shape_cast %61 : vector<1x1x256xf32> to vector<1x256xf32>
    %63 = vector.broadcast %62 : vector<1x256xf32> to vector<16x256xf32>
    %64 = arith.mulf %60, %63 : vector<16x256xf32>
    %65 = arith.addf %56, %64 : vector<16x256xf32>
    %c255_i32 = arith.constant 255 : i32
    %66 = tpu.dynamic_rotate %15 by %c255_i32 dim 1 : vector<16x256xf32>, i32 -> vector<16x256xf32>
    %67 = vector.extract_strided_slice %16 {offsets = [5, 0, 0], sizes = [1, 16, 1], strides = [1, 1, 1]} : vector<9x16x1xf32> to vector<1x16x1xf32>
    %68 = vector.shape_cast %67 : vector<1x16x1xf32> to vector<16x1xf32>
    %69 = vector.broadcast %68 : vector<16x1xf32> to vector<16x256xf32>
    %70 = arith.mulf %66, %69 : vector<16x256xf32>
    %71 = vector.extract_strided_slice %17 {offsets = [5, 0, 0], sizes = [1, 1, 256], strides = [1, 1, 1]} : vector<9x1x256xf32> to vector<1x1x256xf32>
    %72 = vector.shape_cast %71 : vector<1x1x256xf32> to vector<1x256xf32>
    %73 = vector.broadcast %72 : vector<1x256xf32> to vector<16x256xf32>
    %74 = arith.mulf %70, %73 : vector<16x256xf32>
    %75 = arith.addf %65, %74 : vector<16x256xf32>
    %c241_i32 = arith.constant 241 : i32
    %76 = tpu.dynamic_rotate %15 by %c241_i32 dim 1 : vector<16x256xf32>, i32 -> vector<16x256xf32>
    %77 = vector.extract_strided_slice %16 {offsets = [6, 0, 0], sizes = [1, 16, 1], strides = [1, 1, 1]} : vector<9x16x1xf32> to vector<1x16x1xf32>
    %78 = vector.shape_cast %77 : vector<1x16x1xf32> to vector<16x1xf32>
    %79 = vector.broadcast %78 : vector<16x1xf32> to vector<16x256xf32>
    %80 = arith.mulf %76, %79 : vector<16x256xf32>
    %81 = vector.extract_strided_slice %17 {offsets = [6, 0, 0], sizes = [1, 1, 256], strides = [1, 1, 1]} : vector<9x1x256xf32> to vector<1x1x256xf32>
    %82 = vector.shape_cast %81 : vector<1x1x256xf32> to vector<1x256xf32>
    %83 = vector.broadcast %82 : vector<1x256xf32> to vector<16x256xf32>
    %84 = arith.mulf %80, %83 : vector<16x256xf32>
    %85 = arith.addf %75, %84 : vector<16x256xf32>
    %c240_i32 = arith.constant 240 : i32
    %86 = tpu.dynamic_rotate %15 by %c240_i32 dim 1 : vector<16x256xf32>, i32 -> vector<16x256xf32>
    %87 = vector.extract_strided_slice %16 {offsets = [7, 0, 0], sizes = [1, 16, 1], strides = [1, 1, 1]} : vector<9x16x1xf32> to vector<1x16x1xf32>
    %88 = vector.shape_cast %87 : vector<1x16x1xf32> to vector<16x1xf32>
    %89 = vector.broadcast %88 : vector<16x1xf32> to vector<16x256xf32>
    %90 = arith.mulf %86, %89 : vector<16x256xf32>
    %91 = vector.extract_strided_slice %17 {offsets = [7, 0, 0], sizes = [1, 1, 256], strides = [1, 1, 1]} : vector<9x1x256xf32> to vector<1x1x256xf32>
    %92 = vector.shape_cast %91 : vector<1x1x256xf32> to vector<1x256xf32>
    %93 = vector.broadcast %92 : vector<1x256xf32> to vector<16x256xf32>
    %94 = arith.mulf %90, %93 : vector<16x256xf32>
    %95 = arith.addf %85, %94 : vector<16x256xf32>
    %c239_i32 = arith.constant 239 : i32
    %96 = tpu.dynamic_rotate %15 by %c239_i32 dim 1 : vector<16x256xf32>, i32 -> vector<16x256xf32>
    %97 = vector.extract_strided_slice %16 {offsets = [8, 0, 0], sizes = [1, 16, 1], strides = [1, 1, 1]} : vector<9x16x1xf32> to vector<1x16x1xf32>
    %98 = vector.shape_cast %97 : vector<1x16x1xf32> to vector<16x1xf32>
    %99 = vector.broadcast %98 : vector<16x1xf32> to vector<16x256xf32>
    %100 = arith.mulf %96, %99 : vector<16x256xf32>
    %101 = vector.extract_strided_slice %17 {offsets = [8, 0, 0], sizes = [1, 1, 256], strides = [1, 1, 1]} : vector<9x1x256xf32> to vector<1x1x256xf32>
    %102 = vector.shape_cast %101 : vector<1x1x256xf32> to vector<1x256xf32>
    %103 = vector.broadcast %102 : vector<1x256xf32> to vector<16x256xf32>
    %104 = arith.mulf %100, %103 : vector<16x256xf32>
    %105 = arith.addf %95, %104 : vector<16x256xf32>
    %c0_15 = arith.constant 0 : index
    %c0_16 = arith.constant 0 : index
    %106 = vector.load %arg7[%c0_15, %c0_16] : memref<16x1xf32, #tpu.memory_space<vmem>>, vector<16x1xf32>
    %107 = vector.broadcast %106 : vector<16x1xf32> to vector<16x256xf32>
    %108 = arith.mulf %105, %107 : vector<16x256xf32>
    %c0_17 = arith.constant 0 : index
    %c0_18 = arith.constant 0 : index
    %109 = vector.load %arg8[%c0_17, %c0_18] : memref<16x1xf32, #tpu.memory_space<vmem>>, vector<16x1xf32>
    %110 = vector.broadcast %109 : vector<16x1xf32> to vector<16x256xf32>
    %111 = arith.addf %108, %110 : vector<16x256xf32>
    %112 = arith.negf %111 : vector<16x256xf32>
    %113 = math.exp %112 : vector<16x256xf32>
    %cst_19 = arith.constant 1.000000e+00 : f32
    %114 = vector.broadcast %cst_19 : f32 to vector<16x256xf32>
    %115 = arith.addf %114, %113 : vector<16x256xf32>
    %116 = arith.divf %114, %115 : vector<16x256xf32>
    %117 = arith.mulf %111, %116 : vector<16x256xf32>
    %cst_20 = arith.constant dense<0.000000e+00> : vector<16xf32>
    %118 = vector.multi_reduction <add>, %117, %cst_20 [1] : vector<16x256xf32> to vector<16xf32>
    %119 = vector.shape_cast %118 : vector<16xf32> to vector<16x1xf32>
    %cst_21 = arith.constant 3.906250e-03 : f32
    %120 = vector.broadcast %cst_21 : f32 to vector<16x1xf32>
    %121 = arith.mulf %119, %120 : vector<16x1xf32>
    %c0_22 = arith.constant 0 : index
    %c0_23 = arith.constant 0 : index
    %122 = vector.load %arg9[%c0_22, %c0_23] : memref<16x2xf32, #tpu.memory_space<vmem>>, vector<16x2xf32>
    %123 = vector.broadcast %121 : vector<16x1xf32> to vector<16x2xf32>
    %124 = arith.mulf %122, %123 : vector<16x2xf32>
    %cst_24 = arith.constant dense<0.000000e+00> : vector<2xf32>
    %125 = vector.multi_reduction <add>, %124, %cst_24 [0] : vector<16x2xf32> to vector<2xf32>
    %126 = vector.shape_cast %125 : vector<2xf32> to vector<1x2xf32>
    %c0_25 = arith.constant 0 : index
    %c0_26 = arith.constant 0 : index
    %127 = vector.load %arg10[%c0_25, %c0_26] : memref<1x2xf32, #tpu.memory_space<vmem>>, vector<1x2xf32>
    %128 = arith.addf %126, %127 : vector<1x2xf32>
    %129 = arith.negf %128 : vector<1x2xf32>
    %130 = math.exp %129 : vector<1x2xf32>
    %cst_27 = arith.constant 1.000000e+00 : f32
    %131 = vector.broadcast %cst_27 : f32 to vector<1x2xf32>
    %132 = arith.addf %131, %130 : vector<1x2xf32>
    %133 = arith.divf %131, %132 : vector<1x2xf32>
    %134 = arith.mulf %128, %133 : vector<1x2xf32>
    %c0_28 = arith.constant 0 : index
    %c0_29 = arith.constant 0 : index
    %135 = vector.load %arg11[%c0_28, %c0_29] : memref<16x2xf32, #tpu.memory_space<vmem>>, vector<16x2xf32>
    %136 = vector.broadcast %134 : vector<1x2xf32> to vector<16x2xf32>
    %137 = arith.mulf %135, %136 : vector<16x2xf32>
    %cst_30 = arith.constant dense<0.000000e+00> : vector<16xf32>
    %138 = vector.multi_reduction <add>, %137, %cst_30 [1] : vector<16x2xf32> to vector<16xf32>
    %139 = vector.shape_cast %138 : vector<16xf32> to vector<16x1xf32>
    %c0_31 = arith.constant 0 : index
    %c0_32 = arith.constant 0 : index
    %140 = vector.load %arg12[%c0_31, %c0_32] : memref<16x1xf32, #tpu.memory_space<vmem>>, vector<16x1xf32>
    %141 = arith.addf %139, %140 : vector<16x1xf32>
    %142 = arith.negf %141 : vector<16x1xf32>
    %143 = math.exp %142 : vector<16x1xf32>
    %cst_33 = arith.constant 1.000000e+00 : f32
    %144 = vector.broadcast %cst_33 : f32 to vector<16x1xf32>
    %145 = arith.addf %144, %143 : vector<16x1xf32>
    %146 = arith.divf %144, %145 : vector<16x1xf32>
    %147 = vector.broadcast %146 : vector<16x1xf32> to vector<16x256xf32>
    %148 = arith.mulf %117, %147 : vector<16x256xf32>
    %c0_34 = arith.constant 0 : index
    %c0_35 = arith.constant 0 : index
    %149 = vector.load %arg13[%c0_34, %c0_35] : memref<8x16xf32, #tpu.memory_space<vmem>>, vector<8x16xf32>
    %cst_36 = arith.constant dense<0.000000e+00> : vector<8x256xf32>
    %150 = tpu.matmul %149, %148, %cst_36 {dimension_numbers = #tpu.dot_dimension_numbers<[1], [0], [0], [1], [0, 0, 1, 1], [], []>} : vector<8x16xf32>, vector<16x256xf32>, vector<8x256xf32> -> vector<8x256xf32>
    %c0_37 = arith.constant 0 : index
    %c0_38 = arith.constant 0 : index
    %151 = vector.load %arg14[%c0_37, %c0_38] : memref<8x1xf32, #tpu.memory_space<vmem>>, vector<8x1xf32>
    %152 = vector.broadcast %151 : vector<8x1xf32> to vector<8x256xf32>
    %153 = arith.mulf %150, %152 : vector<8x256xf32>
    %c0_39 = arith.constant 0 : index
    %c0_40 = arith.constant 0 : index
    %154 = vector.load %arg15[%c0_39, %c0_40] : memref<8x1xf32, #tpu.memory_space<vmem>>, vector<8x1xf32>
    %155 = vector.broadcast %154 : vector<8x1xf32> to vector<8x256xf32>
    %156 = arith.addf %153, %155 : vector<8x256xf32>
    %157 = arith.addf %156, %1 : vector<8x256xf32>
    %c0_41 = arith.constant 0 : index
    %c0_42 = arith.constant 0 : index
    %c0_43 = arith.constant 0 : index
    %158 = vector.load %arg16[%c0_41, %c0_42, %c0_43] : memref<1x8x256xf32, #tpu.memory_space<vmem>>, vector<1x8x256xf32>
    %159 = vector.shape_cast %158 : vector<1x8x256xf32> to vector<8x256xf32>
    %160 = vector.shape_cast %157 : vector<8x256xf32> to vector<1x8x256xf32>
    tpu.vector_store %arg16[%c0_41, %c0_42, %c0_43], %160 {strides = array<i32>} : memref<1x8x256xf32, #tpu.memory_space<vmem>>, vector<1x8x256xf32>,
    return
  }
  func.func @transform_0(%arg0: i32) -> (i32, i32, i32) {
    %c0_i32 = arith.constant 0 : i32
    %c0_i32_0 = arith.constant 0 : i32
    %c0_i32_1 = arith.constant 0 : i32
    return %arg0, %c0_i32, %c0_i32_0 : i32, i32, i32
  }
  func.func @transform_1(%arg0: i32) -> (i32, i32, i32) {
    %c0_i32 = arith.constant 0 : i32
    %c0_i32_0 = arith.constant 0 : i32
    %c0_i32_1 = arith.constant 0 : i32
    %c0_i32_2 = arith.constant 0 : i32
    return %c0_i32, %c0_i32_0, %c0_i32_1 : i32, i32, i32
  }
  func.func @transform_2(%arg0: i32) -> (i32, i32) {
    %c0_i32 = arith.constant 0 : i32
    %c0_i32_0 = arith.constant 0 : i32
    %c0_i32_1 = arith.constant 0 : i32
    return %c0_i32, %c0_i32_0 : i32, i32
  }
  func.func @transform_3(%arg0: i32) -> (i32, i32) {
    %c0_i32 = arith.constant 0 : i32
    %c0_i32_0 = arith.constant 0 : i32
    %c0_i32_1 = arith.constant 0 : i32
    return %c0_i32, %c0_i32_0 : i32, i32
  }
  func.func @transform_4(%arg0: i32) -> (i32, i32) {
    %c0_i32 = arith.constant 0 : i32
    %c0_i32_0 = arith.constant 0 : i32
    %c0_i32_1 = arith.constant 0 : i32
    return %c0_i32, %c0_i32_0 : i32, i32
  }
  func.func @transform_5(%arg0: i32) -> (i32, i32, i32) {
    %c0_i32 = arith.constant 0 : i32
    %c0_i32_0 = arith.constant 0 : i32
    %c0_i32_1 = arith.constant 0 : i32
    %c0_i32_2 = arith.constant 0 : i32
    return %c0_i32, %c0_i32_0, %c0_i32_1 : i32, i32, i32
  }
  func.func @transform_6(%arg0: i32) -> (i32, i32) {
    %c0_i32 = arith.constant 0 : i32
    %c0_i32_0 = arith.constant 0 : i32
    %c0_i32_1 = arith.constant 0 : i32
    return %c0_i32, %c0_i32_0 : i32, i32
  }
  func.func @transform_7(%arg0: i32) -> (i32, i32) {
    %c0_i32 = arith.constant 0 : i32
    %c0_i32_0 = arith.constant 0 : i32
    %c0_i32_1 = arith.constant 0 : i32
    return %c0_i32, %c0_i32_0 : i32, i32
  }
  func.func @transform_8(%arg0: i32) -> (i32, i32) {
    %c0_i32 = arith.constant 0 : i32
    %c0_i32_0 = arith.constant 0 : i32
    %c0_i32_1 = arith.constant 0 : i32
    return %c0_i32, %c0_i32_0 : i32, i32
  }
  func.func @transform_9(%arg0: i32) -> (i32, i32) {
    %c0_i32 = arith.constant 0 : i32
    %c0_i32_0 = arith.constant 0 : i32
    %c0_i32_1 = arith.constant 0 : i32
    return %c0_i32, %c0_i32_0 : i32, i32
  }
  func.func @transform_10(%arg0: i32) -> (i32, i32) {
    %c0_i32 = arith.constant 0 : i32
    %c0_i32_0 = arith.constant 0 : i32
    %c0_i32_1 = arith.constant 0 : i32
    return %c0_i32, %c0_i32_0 : i32, i32
  }
  func.func @transform_11(%arg0: i32) -> (i32, i32) {
    %c0_i32 = arith.constant 0 : i32
    %c0_i32_0 = arith.constant 0 : i32
    %c0_i32_1 = arith.constant 0 : i32
    return %c0_i32, %c0_i32_0 : i32, i32
  }
  func.func @transform_12(%arg0: i32) -> (i32, i32) {
    %c0_i32 = arith.constant 0 : i32
    %c0_i32_0 = arith.constant 0 : i32
    %c0_i32_1 = arith.constant 0 : i32
    return %c0_i32, %c0_i32_0 : i32, i32
  }
  func.func @transform_13(%arg0: i32) -> (i32, i32) {
    %c0_i32 = arith.constant 0 : i32
    %c0_i32_0 = arith.constant 0 : i32
    %c0_i32_1 = arith.constant 0 : i32
    return %c0_i32, %c0_i32_0 : i32, i32
  }
  func.func @transform_14(%arg0: i32) -> (i32, i32) {
    %c0_i32 = arith.constant 0 : i32
    %c0_i32_0 = arith.constant 0 : i32
    %c0_i32_1 = arith.constant 0 : i32
    return %c0_i32, %c0_i32_0 : i32, i32
  }
  func.func @transform_15(%arg0: i32) -> (i32, i32, i32) {
    %c0_i32 = arith.constant 0 : i32
    %c0_i32_0 = arith.constant 0 : i32
    %c0_i32_1 = arith.constant 0 : i32
    return %arg0, %c0_i32, %c0_i32_0 : i32, i32, i32
  }
}

</mosaic_0001>

<llo_original>
// kernel: mbblock_forward.2
$region0: #{mbblock_forward.2}
  #allocation0 [shape = 'u32[]', space=smem, size = 0x4, offset = 0x4, fixed_abs, tag = 'smem constant byte address 0x4 - core index']
  #allocation1 [shape = 'u32[144,128]{1,0:T(1,128)}', space=vmem, size = 0x12000, scoped, tag = 'internal scratch']
  %s0 = inlined_call_operand.vmem [shape: f32[2,8,256], index: 0, kind: input, shape index: {}]
  %s1 = inlined_call_operand.vmem [shape: f32[9,1,256], index: 1, kind: input, shape index: {}]
  %s2 = inlined_call_operand.vmem [shape: f32[16,8], index: 2, kind: input, shape index: {}]
  %s3 = inlined_call_operand.vmem [shape: f32[16,1], index: 3, kind: input, shape index: {}]
  %s4 = inlined_call_operand.vmem [shape: f32[16,1], index: 4, kind: input, shape index: {}]
  %s5 = inlined_call_operand.vmem [shape: f32[9,16,1], index: 5, kind: input, shape index: {}]
  %s6 = inlined_call_operand.vmem [shape: f32[16,1], index: 6, kind: input, shape index: {}]
  %s7 = inlined_call_operand.vmem [shape: f32[16,1], index: 7, kind: input, shape index: {}]
  %s8 = inlined_call_operand.vmem [shape: f32[16,2], index: 8, kind: input, shape index: {}]
  %s9 = inlined_call_operand.vmem [shape: f32[1,2], index: 9, kind: input, shape index: {}]
  %s10 = inlined_call_operand.vmem [shape: f32[16,2], index: 10, kind: input, shape index: {}]
  %s11 = inlined_call_operand.vmem [shape: f32[16,1], index: 11, kind: input, shape index: {}]
  %s12 = inlined_call_operand.vmem [shape: f32[8,16], index: 12, kind: input, shape index: {}]
  %s13 = inlined_call_operand.vmem [shape: f32[8,1], index: 13, kind: input, shape index: {}]
  %s14 = inlined_call_operand.vmem [shape: f32[8,1], index: 14, kind: input, shape index: {}]
  %s15 = inlined_call_operand.vmem [shape: f32[2,8,256], index: 15, kind: output, shape index: {}]
  %s16 = sld [smem:[#allocation0]]
  $region93: #{mbblock_forward.2} parent=0
    _
  %s18 = ssub.s32 1, %s16
  %s19 = scalar_select 0, %s18, %s16
  loop: start=0, step=1, limit=4
  $region2: #{mbblock_forward.2} parent=0 // loop_pre_header
    _
  $region3: #{mbblock_forward.2} parent=0 // loop_header
    %s21 = sphi 0, %s25
    %p22 = scmp.ge.s32.totalorder %s21, 4
    %s31 = sphi 0, %s33
    %s34 = sphi 0, %s31
    %s35 = sphi 0, %s34
    %s51 = sphi 0, %s35
    %s55 = sphi 0, %s55
    %s57 = sphi 0, %s55
    %s58 = sphi 0, %s57
    %s72 = sphi 0, %s58
    %s76 = sphi 0, %s76
    %s78 = sphi 0, %s76
    %s79 = sphi 0, %s78
    %s93 = sphi 0, %s79
    %s97 = sphi 0, %s97
    %s99 = sphi 0, %s97
    %s100 = sphi 0, %s99
    %s114 = sphi 0, %s100
    %s118 = sphi 0, %s118
    %s120 = sphi 0, %s118
    %s121 = sphi 0, %s120
    %s135 = sphi 0, %s121
    %s139 = sphi 0, %s139
    %s141 = sphi 0, %s139
    %s142 = sphi 0, %s141
    %s156 = sphi 0, %s142
    %s160 = sphi 0, %s160
    %s162 = sphi 0, %s160
    %s163 = sphi 0, %s162
    %s177 = sphi 0, %s163
    %s181 = sphi 0, %s181
    %s183 = sphi 0, %s181
    %s184 = sphi 0, %s183
    %s198 = sphi 0, %s184
    %s202 = sphi 0, %s202
    %s204 = sphi 0, %s202
    %s205 = sphi 0, %s204
    %s219 = sphi 0, %s205
    %s223 = sphi 0, %s223
    %s225 = sphi 0, %s223
    %s226 = sphi 0, %s225
    %s240 = sphi 0, %s226
    %s244 = sphi 0, %s244
    %s246 = sphi 0, %s244
    %s247 = sphi 0, %s246
    %s261 = sphi 0, %s247
    %s265 = sphi 0, %s265
    %s267 = sphi 0, %s265
    %s268 = sphi 0, %s267
    %s282 = sphi 0, %s268
    %s286 = sphi 0, %s286
    %s288 = sphi 0, %s286
    %s289 = sphi 0, %s288
    %s303 = sphi 0, %s289
    %s307 = sphi 0, %s307
    %s309 = sphi 0, %s307
    %s310 = sphi 0, %s309
    %s324 = sphi 0, %s310
    %s328 = sphi 0, %s328
    %s330 = sphi 0, %s328
    %s331 = sphi 0, %s330
    %s345 = sphi 0, %s331
    %s351 = sphi 0, %s353
    %s354 = sphi 0, %s351
    %s355 = sphi 0, %s354
    %s371 = sphi 0, %s355
  $region4: #{mbblock_forward.2} parent=0 // loop_header_branch
    %24 = sbr.rel (%p22) target = $region8
  $region5: #{mbblock_forward.2} parent=0 // loop_body
    %s26 = ssub.s32 %s21, 1
    %s27 = ssub.s32 %s21, 2
    %s28 = sadd.s32 %s21, 1
    %s29 = ssub.s32 %s21, %s28
    %p30 = scmp.eq.s32.totalorder %s29, 0
    %s32 = sadd.s32 %s31, 1
    %s33 = scalar_select %p30, %s31, %s32
    %p36 = pneg %p30
    %p37 = scmp.eq.s32.totalorder %s21, 1
    %p38 = por %p36, %p37
    %p39 = scmp.ne.s32.totalorder %s31, %s34
    %p40 = scmp.eq.s32.totalorder %s21, 0
    %p41 = por %p39, %p40
    %p42 = scmp.ne.s32.totalorder %s31, %s34
    %p43 = scmp.eq.s32.totalorder %s26, 1
    %p44 = por %p42, %p43
    %p45 = scmp.ne.s32.totalorder %s34, %s35
    %p46 = scmp.eq.s32.totalorder %s26, 0
    %p47 = por %p45, %p46
    %p48 = scmp.ne.s32.totalorder %s34, %s35
    %p49 = scmp.eq.s32.totalorder %s27, 1
    %p50 = por %p48, %p49
    %p52 = scmp.ne.s32.totalorder %s35, %s51
    %p53 = scmp.eq.s32.totalorder %s27, 0
    %p54 = por %p52, %p53
    %s56 = sadd.s32 %s55, 1
    %p59 = scmp.eq.s32.totalorder %s21, 1
    %p60 = scmp.ne.s32.totalorder %s55, %s57
    %p61 = scmp.eq.s32.totalorder %s21, 0
    %p62 = por %p60, %p61
    %p63 = scmp.ne.s32.totalorder %s55, %s57
    %p64 = scmp.eq.s32.totalorder %s26, 1
    %p65 = por %p63, %p64
    %p66 = scmp.ne.s32.totalorder %s57, %s58
    %p67 = scmp.eq.s32.totalorder %s26, 0
    %p68 = por %p66, %p67
    %p69 = scmp.ne.s32.totalorder %s57, %s58
    %p70 = scmp.eq.s32.totalorder %s27, 1
    %p71 = por %p69, %p70
    %p73 = scmp.ne.s32.totalorder %s58, %s72
    %p74 = scmp.eq.s32.totalorder %s27, 0
    %p75 = por %p73, %p74
    %s77 = sadd.s32 %s76, 1
    %p80 = scmp.eq.s32.totalorder %s21, 1
    %p81 = scmp.ne.s32.totalorder %s76, %s78
    %p82 = scmp.eq.s32.totalorder %s21, 0
    %p83 = por %p81, %p82
    %p84 = scmp.ne.s32.totalorder %s76, %s78
    %p85 = scmp.eq.s32.totalorder %s26, 1
    %p86 = por %p84, %p85
    %p87 = scmp.ne.s32.totalorder %s78, %s79
    %p88 = scmp.eq.s32.totalorder %s26, 0
    %p89 = por %p87, %p88
    %p90 = scmp.ne.s32.totalorder %s78, %s79
    %p91 = scmp.eq.s32.totalorder %s27, 1
    %p92 = por %p90, %p91
    %p94 = scmp.ne.s32.totalorder %s79, %s93
    %p95 = scmp.eq.s32.totalorder %s27, 0
    %p96 = por %p94, %p95
    %s98 = sadd.s32 %s97, 1
    %p101 = scmp.eq.s32.totalorder %s21, 1
    %p102 = scmp.ne.s32.totalorder %s97, %s99
    %p103 = scmp.eq.s32.totalorder %s21, 0
    %p104 = por %p102, %p103
    %p105 = scmp.ne.s32.totalorder %s97, %s99
    %p106 = scmp.eq.s32.totalorder %s26, 1
    %p107 = por %p105, %p106
    %p108 = scmp.ne.s32.totalorder %s99, %s100
    %p109 = scmp.eq.s32.totalorder %s26, 0
    %p110 = por %p108, %p109
    %p111 = scmp.ne.s32.totalorder %s99, %s100
    %p112 = scmp.eq.s32.totalorder %s27, 1
    %p113 = por %p111, %p112
    %p115 = scmp.ne.s32.totalorder %s100, %s114
    %p116 = scmp.eq.s32.totalorder %s27, 0
    %p117 = por %p115, %p116
    %s119 = sadd.s32 %s118, 1
    %p122 = scmp.eq.s32.totalorder %s21, 1
    %p123 = scmp.ne.s32.totalorder %s118, %s120
    %p124 = scmp.eq.s32.totalorder %s21, 0
    %p125 = por %p123, %p124
    %p126 = scmp.ne.s32.totalorder %s118, %s120
    %p127 = scmp.eq.s32.totalorder %s26, 1
    %p128 = por %p126, %p127
    %p129 = scmp.ne.s32.totalorder %s120, %s121
    %p130 = scmp.eq.s32.totalorder %s26, 0
    %p131 = por %p129, %p130
    %p132 = scmp.ne.s32.totalorder %s120, %s121
    %p133 = scmp.eq.s32.totalorder %s27, 1
    %p134 = por %p132, %p133
    %p136 = scmp.ne.s32.totalorder %s121, %s135
    %p137 = scmp.eq.s32.totalorder %s27, 0
    %p138 = por %p136, %p137
    %s140 = sadd.s32 %s139, 1
    %p143 = scmp.eq.s32.totalorder %s21, 1
    %p144 = scmp.ne.s32.totalorder %s139, %s141
    %p145 = scmp.eq.s32.totalorder %s21, 0
    %p146 = por %p144, %p145
    %p147 = scmp.ne.s32.totalorder %s139, %s141
    %p148 = scmp.eq.s32.totalorder %s26, 1
    %p149 = por %p147, %p148
    %p150 = scmp.ne.s32.totalorder %s141, %s142
    %p151 = scmp.eq.s32.totalorder %s26, 0
    %p152 = por %p150, %p151
    %p153 = scmp.ne.s32.totalorder %s141, %s142
    %p154 = scmp.eq.s32.totalorder %s27, 1
    %p155 = por %p153, %p154
    %p157 = scmp.ne.s32.totalorder %s142, %s156
    %p158 = scmp.eq.s32.totalorder %s27, 0
    %p159 = por %p157, %p158
    %s161 = sadd.s32 %s160, 1
    %p164 = scmp.eq.s32.totalorder %s21, 1
    %p165 = scmp.ne.s32.totalorder %s160, %s162
    %p166 = scmp.eq.s32.totalorder %s21, 0
    %p167 = por %p165, %p166
    %p168 = scmp.ne.s32.totalorder %s160, %s162
    %p169 = scmp.eq.s32.totalorder %s26, 1
    %p170 = por %p168, %p169
    %p171 = scmp.ne.s32.totalorder %s162, %s163
    %p172 = scmp.eq.s32.totalorder %s26, 0
    %p173 = por %p171, %p172
    %p174 = scmp.ne.s32.totalorder %s162, %s163
    %p175 = scmp.eq.s32.totalorder %s27, 1
    %p176 = por %p174, %p175
    %p178 = scmp.ne.s32.totalorder %s163, %s177
    %p179 = scmp.eq.s32.totalorder %s27, 0
    %p180 = por %p178, %p179
    %s182 = sadd.s32 %s181, 1
    %p185 = scmp.eq.s32.totalorder %s21, 1
    %p186 = scmp.ne.s32.totalorder %s181, %s183
    %p187 = scmp.eq.s32.totalorder %s21, 0
    %p188 = por %p186, %p187
    %p189 = scmp.ne.s32.totalorder %s181, %s183
    %p190 = scmp.eq.s32.totalorder %s26, 1
    %p191 = por %p189, %p190
    %p192 = scmp.ne.s32.totalorder %s183, %s184
    %p193 = scmp.eq.s32.totalorder %s26, 0
    %p194 = por %p192, %p193
    %p195 = scmp.ne.s32.totalorder %s183, %s184
    %p196 = scmp.eq.s32.totalorder %s27, 1
    %p197 = por %p195, %p196
    %p199 = scmp.ne.s32.totalorder %s184, %s198
    %p200 = scmp.eq.s32.totalorder %s27, 0
    %p201 = por %p199, %p200
    %s203 = sadd.s32 %s202, 1
    %p206 = scmp.eq.s32.totalorder %s21, 1
    %p207 = scmp.ne.s32.totalorder %s202, %s204
    %p208 = scmp.eq.s32.totalorder %s21, 0
    %p209 = por %p207, %p208
    %p210 = scmp.ne.s32.totalorder %s202, %s204
    %p211 = scmp.eq.s32.totalorder %s26, 1
    %p212 = por %p210, %p211
    %p213 = scmp.ne.s32.totalorder %s204, %s205
    %p214 = scmp.eq.s32.totalorder %s26, 0
    %p215 = por %p213, %p214
    %p216 = scmp.ne.s32.totalorder %s204, %s205
    %p217 = scmp.eq.s32.totalorder %s27, 1
    %p218 = por %p216, %p217
    %p220 = scmp.ne.s32.totalorder %s205, %s219
    %p221 = scmp.eq.s32.totalorder %s27, 0
    %p222 = por %p220, %p221
    %s224 = sadd.s32 %s223, 1
    %p227 = scmp.eq.s32.totalorder %s21, 1
    %p228 = scmp.ne.s32.totalorder %s223, %s225
    %p229 = scmp.eq.s32.totalorder %s21, 0
    %p230 = por %p228, %p229
    %p231 = scmp.ne.s32.totalorder %s223, %s225
    %p232 = scmp.eq.s32.totalorder %s26, 1
    %p233 = por %p231, %p232
    %p234 = scmp.ne.s32.totalorder %s225, %s226
    %p235 = scmp.eq.s32.totalorder %s26, 0
    %p236 = por %p234, %p235
    %p237 = scmp.ne.s32.totalorder %s225, %s226
    %p238 = scmp.eq.s32.totalorder %s27, 1
    %p239 = por %p237, %p238
    %p241 = scmp.ne.s32.totalorder %s226, %s240
    %p242 = scmp.eq.s32.totalorder %s27, 0
    %p243 = por %p241, %p242
    %s245 = sadd.s32 %s244, 1
    %p248 = scmp.eq.s32.totalorder %s21, 1
    %p249 = scmp.ne.s32.totalorder %s244, %s246
    %p250 = scmp.eq.s32.totalorder %s21, 0
    %p251 = por %p249, %p250
    %p252 = scmp.ne.s32.totalorder %s244, %s246
    %p253 = scmp.eq.s32.totalorder %s26, 1
    %p254 = por %p252, %p253
    %p255 = scmp.ne.s32.totalorder %s246, %s247
    %p256 = scmp.eq.s32.totalorder %s26, 0
    %p257 = por %p255, %p256
    %p258 = scmp.ne.s32.totalorder %s246, %s247
    %p259 = scmp.eq.s32.totalorder %s27, 1
    %p260 = por %p258, %p259
    %p262 = scmp.ne.s32.totalorder %s247, %s261
    %p263 = scmp.eq.s32.totalorder %s27, 0
    %p264 = por %p262, %p263
    %s266 = sadd.s32 %s265, 1
    %p269 = scmp.eq.s32.totalorder %s21, 1
    %p270 = scmp.ne.s32.totalorder %s265, %s267
    %p271 = scmp.eq.s32.totalorder %s21, 0
    %p272 = por %p270, %p271
    %p273 = scmp.ne.s32.totalorder %s265, %s267
    %p274 = scmp.eq.s32.totalorder %s26, 1
    %p275 = por %p273, %p274
    %p276 = scmp.ne.s32.totalorder %s267, %s268
    %p277 = scmp.eq.s32.totalorder %s26, 0
    %p278 = por %p276, %p277
    %p279 = scmp.ne.s32.totalorder %s267, %s268
    %p280 = scmp.eq.s32.totalorder %s27, 1
    %p281 = por %p279, %p280
    %p283 = scmp.ne.s32.totalorder %s268, %s282
    %p284 = scmp.eq.s32.totalorder %s27, 0
    %p285 = por %p283, %p284
    %s287 = sadd.s32 %s286, 1
    %p290 = scmp.eq.s32.totalorder %s21, 1
    %p291 = scmp.ne.s32.totalorder %s286, %s288
    %p292 = scmp.eq.s32.totalorder %s21, 0
    %p293 = por %p291, %p292
    %p294 = scmp.ne.s32.totalorder %s286, %s288
    %p295 = scmp.eq.s32.totalorder %s26, 1
    %p296 = por %p294, %p295
    %p297 = scmp.ne.s32.totalorder %s288, %s289
    %p298 = scmp.eq.s32.totalorder %s26, 0
    %p299 = por %p297, %p298
    %p300 = scmp.ne.s32.totalorder %s288, %s289
    %p301 = scmp.eq.s32.totalorder %s27, 1
    %p302 = por %p300, %p301
    %p304 = scmp.ne.s32.totalorder %s289, %s303
    %p305 = scmp.eq.s32.totalorder %s27, 0
    %p306 = por %p304, %p305
    %s308 = sadd.s32 %s307, 1
    %p311 = scmp.eq.s32.totalorder %s21, 1
    %p312 = scmp.ne.s32.totalorder %s307, %s309
    %p313 = scmp.eq.s32.totalorder %s21, 0
    %p314 = por %p312, %p313
    %p315 = scmp.ne.s32.totalorder %s307, %s309
    %p316 = scmp.eq.s32.totalorder %s26, 1
    %p317 = por %p315, %p316
    %p318 = scmp.ne.s32.totalorder %s309, %s310
    %p319 = scmp.eq.s32.totalorder %s26, 0
    %p320 = por %p318, %p319
    %p321 = scmp.ne.s32.totalorder %s309, %s310
    %p322 = scmp.eq.s32.totalorder %s27, 1
    %p323 = por %p321, %p322
    %p325 = scmp.ne.s32.totalorder %s310, %s324
    %p326 = scmp.eq.s32.totalorder %s27, 0
    %p327 = por %p325, %p326
    %s329 = sadd.s32 %s328, 1
    %p332 = scmp.eq.s32.totalorder %s21, 1
    %p333 = scmp.ne.s32.totalorder %s328, %s330
    %p334 = scmp.eq.s32.totalorder %s21, 0
    %p335 = por %p333, %p334
    %p336 = scmp.ne.s32.totalorder %s328, %s330
    %p337 = scmp.eq.s32.totalorder %s26, 1
    %p338 = por %p336, %p337
    %p339 = scmp.ne.s32.totalorder %s330, %s331
    %p340 = scmp.eq.s32.totalorder %s26, 0
    %p341 = por %p339, %p340
    %p342 = scmp.ne.s32.totalorder %s330, %s331
    %p343 = scmp.eq.s32.totalorder %s27, 1
    %p344 = por %p342, %p343
    %p346 = scmp.ne.s32.totalorder %s331, %s345
    %p347 = scmp.eq.s32.totalorder %s27, 0
    %p348 = por %p346, %p347
    %s349 = ssub.s32 %s21, %s28
    %p350 = scmp.eq.s32.totalorder %s349, 0
    %s352 = sadd.s32 %s351, 1
    %s353 = scalar_select %p350, %s351, %s352
    %p356 = pneg %p350
    %p357 = scmp.eq.s32.totalorder %s21, 1
    %p358 = por %p356, %p357
    %p359 = scmp.ne.s32.totalorder %s351, %s354
    %p360 = scmp.eq.s32.totalorder %s21, 0
    %p361 = por %p359, %p360
    %p362 = scmp.ne.s32.totalorder %s351, %s354
    %p363 = scmp.eq.s32.totalorder %s26, 1
    %p364 = por %p362, %p363
    %p365 = scmp.ne.s32.totalorder %s354, %s355
    %p366 = scmp.eq.s32.totalorder %s26, 0
    %p367 = por %p365, %p366
    %p368 = scmp.ne.s32.totalorder %s354, %s355
    %p369 = scmp.eq.s32.totalorder %s27, 1
    %p370 = por %p368, %p369
    %p372 = scmp.ne.s32.totalorder %s355, %s371
    %p373 = scmp.eq.s32.totalorder %s27, 0
    %p374 = por %p372, %p373
    %p375 = scmp.le.s32.totalorder 1, %s21
    %p376 = scmp.lt.s32.totalorder %s21, 3
    %p377 = pnand %p375, %p376
    %p378 = pneg %p377
    // Predicated region
    $region9: #{mbblock_forward.2} parent=5 // pred_check
      _
    $region10: #{mbblock_forward.2} parent=5 // pred_check_branch
      %380 = sbr.rel (%p377) target = $region12
    $region11: #{mbblock_forward.2} parent=5 // pred_region
      %s381 = ssub.s32 %s21, 1
      // Predicated region
      $region13: #{mbblock_forward.2} parent=11 // pred_check
        %p382 = pneg %p68
      $region14: #{mbblock_forward.2} parent=11 // pred_check_branch
        %384 = sbr.rel (%p382) target = $region16
      $region15: #{mbblock_forward.2} parent=11 // pred_region
        _
      $region16: #{mbblock_forward.2} parent=11 // pred_fallthru
        _
      // Predicated region
      $region17: #{mbblock_forward.2} parent=11 // pred_check
        %p385 = pneg %p89
      $region18: #{mbblock_forward.2} parent=11 // pred_check_branch
        %387 = sbr.rel (%p385) target = $region20
      $region19: #{mbblock_forward.2} parent=11 // pred_region
        _
      $region20: #{mbblock_forward.2} parent=11 // pred_fallthru
        _
      // Predicated region
      $region21: #{mbblock_forward.2} parent=11 // pred_check
        %p388 = pneg %p110
      $region22: #{mbblock_forward.2} parent=11 // pred_check_branch
        %390 = sbr.rel (%p388) target = $region24
      $region23: #{mbblock_forward.2} parent=11 // pred_region
        _
      $region24: #{mbblock_forward.2} parent=11 // pred_fallthru
        _
      // Predicated region
      $region25: #{mbblock_forward.2} parent=11 // pred_check
        %p391 = pneg %p131
      $region26: #{mbblock_forward.2} parent=11 // pred_check_branch
        %393 = sbr.rel (%p391) target = $region28
      $region27: #{mbblock_forward.2} parent=11 // pred_region
        _
      $region28: #{mbblock_forward.2} parent=11 // pred_fallthru
        _
      // Predicated region
      $region29: #{mbblock_forward.2} parent=11 // pred_check
        %p394 = pneg %p152
      $region30: #{mbblock_forward.2} parent=11 // pred_check_branch
        %396 = sbr.rel (%p394) target = $region32
      $region31: #{mbblock_forward.2} parent=11 // pred_region
        _
      $region32: #{mbblock_forward.2} parent=11 // pred_fallthru
        _
      // Predicated region
      $region33: #{mbblock_forward.2} parent=11 // pred_check
        %p397 = pneg %p173
      $region34: #{mbblock_forward.2} parent=11 // pred_check_branch
        %399 = sbr.rel (%p397) target = $region36
      $region35: #{mbblock_forward.2} parent=11 // pred_region
        _
      $region36: #{mbblock_forward.2} parent=11 // pred_fallthru
        _
      // Predicated region
      $region37: #{mbblock_forward.2} parent=11 // pred_check
        %p400 = pneg %p194
      $region38: #{mbblock_forward.2} parent=11 // pred_check_branch
        %402 = sbr.rel (%p400) target = $region40
      $region39: #{mbblock_forward.2} parent=11 // pred_region
        _
      $region40: #{mbblock_forward.2} parent=11 // pred_fallthru
        _
      // Predicated region
      $region41: #{mbblock_forward.2} parent=11 // pred_check
        %p403 = pneg %p215
      $region42: #{mbblock_forward.2} parent=11 // pred_check_branch
        %405 = sbr.rel (%p403) target = $region44
      $region43: #{mbblock_forward.2} parent=11 // pred_region
        _
      $region44: #{mbblock_forward.2} parent=11 // pred_fallthru
        _
      // Predicated region
      $region45: #{mbblock_forward.2} parent=11 // pred_check
        %p406 = pneg %p236
      $region46: #{mbblock_forward.2} parent=11 // pred_check_branch
        %408 = sbr.rel (%p406) target = $region48
      $region47: #{mbblock_forward.2} parent=11 // pred_region
        _
      $region48: #{mbblock_forward.2} parent=11 // pred_fallthru
        _
      // Predicated region
      $region49: #{mbblock_forward.2} parent=11 // pred_check
        %p409 = pneg %p257
      $region50: #{mbblock_forward.2} parent=11 // pred_check_branch
        %411 = sbr.rel (%p409) target = $region52
      $region51: #{mbblock_forward.2} parent=11 // pred_region
        _
      $region52: #{mbblock_forward.2} parent=11 // pred_fallthru
        _
      // Predicated region
      $region53: #{mbblock_forward.2} parent=11 // pred_check
        %p412 = pneg %p278
      $region54: #{mbblock_forward.2} parent=11 // pred_check_branch
        %414 = sbr.rel (%p412) target = $region56
      $region55: #{mbblock_forward.2} parent=11 // pred_region
        _
      $region56: #{mbblock_forward.2} parent=11 // pred_fallthru
        _
      // Predicated region
      $region57: #{mbblock_forward.2} parent=11 // pred_check
        %p415 = pneg %p299
      $region58: #{mbblock_forward.2} parent=11 // pred_check_branch
        %417 = sbr.rel (%p415) target = $region60
      $region59: #{mbblock_forward.2} parent=11 // pred_region
        _
      $region60: #{mbblock_forward.2} parent=11 // pred_fallthru
        _
      // Predicated region
      $region61: #{mbblock_forward.2} parent=11 // pred_check
        %p418 = pneg %p320
      $region62: #{mbblock_forward.2} parent=11 // pred_check_branch
        %420 = sbr.rel (%p418) target = $region64
      $region63: #{mbblock_forward.2} parent=11 // pred_region
        _
      $region64: #{mbblock_forward.2} parent=11 // pred_fallthru
        _
      // Predicated region
      $region65: #{mbblock_forward.2} parent=11 // pred_check
        %p421 = pneg %p341
      $region66: #{mbblock_forward.2} parent=11 // pred_check_branch
        %423 = sbr.rel (%p421) target = $region68
      $region67: #{mbblock_forward.2} parent=11 // pred_region
        _
      $region68: #{mbblock_forward.2} parent=11 // pred_fallthru
        _
    $region12: #{mbblock_forward.2} parent=5 // pred_fallthru
      _
    %p424 = scmp.lt.s32.totalorder %s21, 2
    // Predicated region
    $region69: #{mbblock_forward.2} parent=5 // pred_check
      %p425 = pneg %p424
    $region70: #{mbblock_forward.2} parent=5 // pred_check_branch
      %427 = sbr.rel (%p425) target = $region72
    $region71: #{mbblock_forward.2} parent=5 // pred_region
      // Predicated region
      $region73: #{mbblock_forward.2} parent=71 // pred_check
        %p428 = pneg %p41
      $region74: #{mbblock_forward.2} parent=71 // pred_check_branch
        %430 = sbr.rel (%p428) target = $region76
      $region75: #{mbblock_forward.2} parent=71 // pred_region
        %p431 = scmp.lt.s32.totalorder %s21, 1
        %s432 = scalar_select %p431, %s21, 1
        %s433 = smul.addr %s432, 2
        %s434 = smul.addr %s433, 8
        %s435 = scalar_lea.vmem %s0, %s434
      $region76: #{mbblock_forward.2} parent=71 // pred_fallthru
        _
    $region72: #{mbblock_forward.2} parent=5 // pred_fallthru
      _
    %p436 = scmp.le.s32.totalorder 1, %s21
    %p437 = scmp.lt.s32.totalorder %s21, 3
    %p438 = pnand %p436, %p437
    %p439 = pneg %p438
    // Predicated region
    $region77: #{mbblock_forward.2} parent=5 // pred_check
      _
    $region78: #{mbblock_forward.2} parent=5 // pred_check_branch
      %441 = sbr.rel (%p438) target = $region80
    $region79: #{mbblock_forward.2} parent=5 // pred_region
      %s442 = ssub.s32 %s21, 1
      %p443 = scmp.lt.s32.totalorder %s26, 1
      %s444 = scalar_select %p443, %s26, 1
      %s445 = smul.addr %s444, 2
      %s446 = smul.addr %s445, 8
      %s447 = scalar_lea.vmem %s0, %s446
      %p448 = pneg %p47
      %p449 = pneg %p44
      %p450 = pneg %p68
      %p451 = pneg %p65
      %p452 = pneg %p89
      %p453 = pneg %p86
      %p454 = pneg %p110
      %p455 = pneg %p107
      %p456 = pneg %p131
      %p457 = pneg %p128
      %p458 = pneg %p152
      %p459 = pneg %p149
      %p460 = pneg %p173
      %p461 = pneg %p170
      %p462 = pneg %p194
      %p463 = pneg %p191
      %p464 = pneg %p215
      %p465 = pneg %p212
      %p466 = pneg %p236
      %p467 = pneg %p233
      %p468 = pneg %p257
      %p469 = pneg %p254
      %p470 = pneg %p278
      %p471 = pneg %p275
      %p472 = pneg %p299
      %p473 = pneg %p296
      %p474 = pneg %p320
      %p475 = pneg %p317
      %p476 = pneg %p341
      %p477 = pneg %p338
      %p478 = pneg %p367
      %p479 = pneg %p364
      %p480 = scmp.lt.s32.totalorder %s26, 1
      %s481 = scalar_select %p480, %s26, 1
      %s482 = smul.addr %s481, 2
      %s483 = smul.addr %s482, 8
      %s484 = scalar_lea.vmem %s15, %s483
      %p485 = scmp.lt.s32.totalorder %s26, 1
      %s486 = scalar_select %p485, %s26, 1
      %s487 = smul.addr %s486, 2
      %s488 = smul.addr %s487, 8
      %s489 = scalar_lea.vmem %s0, %s488
      %p490 = scmp.lt.s32.totalorder %s26, 1
      %s491 = scalar_select %p490, %s26, 1
      %s492 = smul.addr %s491, 2
      %s493 = smul.addr %s492, 8
      %s494 = scalar_lea.vmem %s15, %s493
      %v495 = vld [vmem:[%s489] sm:$0xff]
      %v496 = vld [vmem:[%s489 + $0x8] sm:$0xff]
      %v497 = vld [vmem:[%s2] sm:$0xff]
      %v498 = vld [vmem:[%s2 + $0x8] sm:$0xff]
      %vm499 = vcmask 64512
      %v501 = vsel %vm499, %v497, 0
      %v504 = vsel %vm499, %v498, 0
      %506 = vmatprep.subr.mxu0 %v496
      %507 = vmatpush1.msra.mxu0 %v495
      %508 = vmatprep.subr.mxu0 0.0
      %509 = vmatpush1.msra.mxu0 0.0
      %510 = vmatprep.subr.mxu0 0.0
      %511 = vmatpush1.msra.mxu0 0.0
      %512 = vmatprep.subr.mxu0 0.0
      %513 = vmatpush1.msra.mxu0 0.0
      %514 = vmatprep.subr.mxu0 0.0
      %515 = vmatpush1.msra.mxu0 0.0
      %516 = vmatprep.subr.mxu0 0.0
      %517 = vmatpush1.msra.mxu0 0.0
      %518 = vmatprep.subr.mxu0 0.0
      %519 = vmatpush1.msra.mxu0 0.0
      %520 = vmatprep.subr.mxu0 0.0
      %521 = vmatpush1.msra.mxu0 0.0
      %522 = vmatprep.subr.mxu0 0.0
      %523 = vmatpush1.msra.mxu0 0.0
      %524 = vmatprep.subr.mxu0 0.0
      %525 = vmatpush1.msra.mxu0 0.0
      %526 = vmatprep.subr.mxu0 0.0
      %527 = vmatpush1.msra.mxu0 0.0
      %528 = vmatprep.subr.mxu0 0.0
      %529 = vmatpush1.msra.mxu0 0.0
      %530 = vmatprep.subr.mxu0 0.0
      %531 = vmatpush1.msra.mxu0 0.0
      %532 = vmatprep.subr.mxu0 0.0
      %533 = vmatpush1.msra.mxu0 0.0
      %534 = vmatprep.subr.mxu0 0.0
      %535 = vmatpush1.msra.mxu0 0.0
      %536 = vmatprep.subr.mxu0 0.0
      %537 = vmatpush1.msra.mxu0 0.0
      %538 = vmatprep.subr.mxu0 0.0
      %539 = vmatpush1.msra.mxu0 0.0
      %540 = vmatprep.subr.mxu0 0.0
      %541 = vmatpush1.msra.mxu0 0.0
      %542 = vmatprep.subr.mxu0 0.0
      %543 = vmatpush1.msra.mxu0 0.0
      %544 = vmatprep.subr.mxu0 0.0
      %545 = vmatpush1.msra.mxu0 0.0
      %546 = vmatprep.subr.mxu0 0.0
      %547 = vmatpush1.msra.mxu0 0.0
      %548 = vmatprep.subr.mxu0 0.0
      %549 = vmatpush1.msra.mxu0 0.0
      %550 = vmatprep.subr.mxu0 0.0
      %551 = vmatpush1.msra.mxu0 0.0
      %552 = vmatprep.subr.mxu0 0.0
      %553 = vmatpush1.msra.mxu0 0.0
      %554 = vmatprep.subr.mxu0 0.0
      %555 = vmatpush1.msra.mxu0 0.0
      %556 = vmatprep.subr.mxu0 0.0
      %557 = vmatpush1.msra.mxu0 0.0
      %558 = vmatprep.subr.mxu0 0.0
      %559 = vmatpush1.msra.mxu0 0.0
      %560 = vmatprep.subr.mxu0 0.0
      %561 = vmatpush1.msra.mxu0 0.0
      %562 = vmatprep.subr.mxu0 0.0
      %563 = vmatpush1.msra.mxu0 0.0
      %564 = vmatprep.subr.mxu0 0.0
      %565 = vmatpush1.msra.mxu0 0.0
      %566 = vmatprep.subr.mxu0 0.0
      %567 = vmatpush1.msra.mxu0 0.0
      %568 = vmatprep.subr.mxu0 0.0
      %569 = vmatpush1.msra.mxu0 0.0
      %570 = vmatprep.mubr.f32.mxu0 0.0
      %571 = vmatmul.mubr.f32.gmra.mrb[0].mxu0 %v501
      %v572 = vpop.f32.mrb[0].mxu0
      %v573 = vadd.f32 0.0, %v572
      %v574 = vpop.f32.mrb[0].mxu0
      %v575 = vadd.f32 0.0, %v574
      %576 = vmatprep.mubr.f32.mxu0 0.0
      %577 = vmatmul.mubr.f32.gmra.mrb[0].mxu0 %v504
      %v578 = vpop.f32.mrb[0].mxu0
      %v579 = vadd.f32 0.0, %v578
      %v580 = vpop.f32.mrb[0].mxu0
      %v581 = vadd.f32 0.0, %v580
      %582 = vdwg.mxu0
      %v583 = vld [vmem:[%s3] sm:$0xff]
      %v584 = vld [vmem:[%s3 + $0x8] sm:$0xff]
      %586 = vset.pattern.permute.xlu0 0
      %587 = vperm.xlu0 %586, %v583
      %v588 = vpop.permute.xlu0 %587
      %591 = vset.pattern.permute.xlu0 0
      %592 = vperm.xlu0 %591, %v584
      %v593 = vpop.permute.xlu0 %592
      %v595 = vmul.f32 %v573, %v588
      %v596 = vmul.f32 %v575, %v588
      %v597 = vmul.f32 %v579, %v593
      %v598 = vmul.f32 %v581, %v593
      %v599 = vld [vmem:[%s4] sm:$0xff]
      %v600 = vld [vmem:[%s4 + $0x8] sm:$0xff]
      %602 = vset.pattern.permute.xlu0 0
      %603 = vperm.xlu0 %602, %v599
      %v604 = vpop.permute.xlu0 %603
      %607 = vset.pattern.permute.xlu0 0
      %608 = vperm.xlu0 %607, %v600
      %v609 = vpop.permute.xlu0 %608
      %v611 = vadd.f32 %v595, %v604
      %v612 = vadd.f32 %v596, %v604
      %v613 = vadd.f32 %v597, %v609
      %v614 = vadd.f32 %v598, %v609
      %v615 = vxor.u32 %v611, 2147483648
      %v616 = vxor.u32 %v612, 2147483648
      %v617 = vxor.u32 %v613, 2147483648
      %v618 = vxor.u32 %v614, 2147483648
      %v619 = vmul.f32 %v615, 1.442695
      %v620 = vpow.pop %v619
      %v621 = vmul.f32 %v616, 1.442695
      %v622 = vpow.pop %v621
      %v623 = vmul.f32 %v617, 1.442695
      %v624 = vpow.pop %v623
      %v625 = vmul.f32 %v618, 1.442695
      %v626 = vpow.pop %v625
      %v627 = vadd.f32 %v620, 1.0
      %v628 = vadd.f32 %v622, 1.0
      %v629 = vadd.f32 %v624, 1.0
      %v630 = vadd.f32 %v626, 1.0
      %v631 = vrcp.pop %v627
      %v632 = vmul.f32 1.0, %v631
      %v633 = vrcp.pop %v628
      %v634 = vmul.f32 1.0, %v633
      %v635 = vrcp.pop %v629
      %v636 = vmul.f32 1.0, %v635
      %v637 = vrcp.pop %v630
      %v638 = vmul.f32 1.0, %v637
      %v639 = vmul.f32 %v611, %v632
      %v640 = vmul.f32 %v612, %v634
      %v641 = vmul.f32 %v613, %v636
      %v642 = vmul.f32 %v614, %v638
      %v643 = vld [vmem:[%s5] sm:$0xff]
      %v644 = vld [vmem:[%s5 + $0x8] sm:$0xff]
      %v645 = vld [vmem:[%s5 + $0x10] sm:$0xff]
      %v646 = vld [vmem:[%s5 + $0x18] sm:$0xff]
      %v647 = vld [vmem:[%s5 + $0x20] sm:$0xff]
      %v648 = vld [vmem:[%s5 + $0x28] sm:$0xff]
      %v649 = vld [vmem:[%s5 + $0x30] sm:$0xff]
      %v650 = vld [vmem:[%s5 + $0x38] sm:$0xff]
      %v651 = vld [vmem:[%s5 + $0x40] sm:$0xff]
      %v652 = vld [vmem:[%s5 + $0x48] sm:$0xff]
      %v653 = vld [vmem:[%s5 + $0x50] sm:$0xff]
      %v654 = vld [vmem:[%s5 + $0x58] sm:$0xff]
      %v655 = vld [vmem:[%s5 + $0x60] sm:$0xff]
      %v656 = vld [vmem:[%s5 + $0x68] sm:$0xff]
      %v657 = vld [vmem:[%s5 + $0x70] sm:$0xff]
      %v658 = vld [vmem:[%s5 + $0x78] sm:$0xff]
      %v659 = vld [vmem:[%s5 + $0x80] sm:$0xff]
      %v660 = vld [vmem:[%s5 + $0x88] sm:$0xff]
      %v661 = vld [vmem:[%s1] sm:$0x3]
      %v662 = vld [vmem:[%s1 + $0x2] sm:$0x3]
      %v663 = vld [vmem:[%s1 + $0x4] sm:$0x3]
      %v664 = vld [vmem:[%s1 + $0x6] sm:$0x3]
      %v665 = vld [vmem:[%s1 + $0x8] sm:$0x3]
      %v666 = vld [vmem:[%s1 + $0xa] sm:$0x3]
      %v667 = vld [vmem:[%s1 + $0xc] sm:$0x3]
      %v668 = vld [vmem:[%s1 + $0xe] sm:$0x3]
      %v669 = vld [vmem:[%s1 + $0x10] sm:$0x3]
      %670 = vrot.lane.b32.xlu0 %v639, 17
      %v671 = vpop.permute.xlu0 %670
      %672 = vrot.lane.b32.xlu0 %v641, 17
      %v673 = vpop.permute.xlu0 %672
      %674 = vrot.lane.b32.xlu0 %v640, 17
      %v675 = vpop.permute.xlu0 %674
      %676 = vrot.lane.b32.xlu0 %v642, 17
      %v677 = vpop.permute.xlu0 %676
      %v678 = vlaneseq
      %v679 = vand.u32 %v678, 127
      %vm680 = vcmp.lt.s32.totalorder %v679, 17
      %v681 = vsel %vm680, %v671, %v675
      %v682 = vsel %vm680, %v673, %v677
      %v683 = vsel %vm680, %v675, %v671
      %v684 = vsel %vm680, %v677, %v673
      %686 = vset.pattern.permute.xlu0 0
      %687 = vperm.xlu0 %686, %v643
      %v688 = vpop.permute.xlu0 %687
      %691 = vset.pattern.permute.xlu0 0
      %692 = vperm.xlu0 %691, %v644
      %v693 = vpop.permute.xlu0 %692
      %v695 = vmul.f32 %v683, %v688
      %v696 = vmul.f32 %v681, %v688
      %v697 = vmul.f32 %v684, %v693
      %v698 = vmul.f32 %v682, %v693
      %v700 = vlaneseq
      %v701 = vshrl.u32 %v700, 7
      %v702 = vsub.s32 0, %v701
      %v703 = vrot.slane %v661, %v702
      %v704 = vlaneseq
      %v705 = vshrl.u32 %v704, 7
      %v706 = vsub.s32 1, %v705
      %v707 = vrot.slane %v661, %v706
      %v710 = vmul.f32 %v695, %v703
      %v711 = vmul.f32 %v696, %v707
      %v712 = vmul.f32 %v697, %v703
      %v713 = vmul.f32 %v698, %v707
      %714 = vrot.lane.b32.xlu0 %v639, 16
      %v715 = vpop.permute.xlu0 %714
      %716 = vrot.lane.b32.xlu0 %v641, 16
      %v717 = vpop.permute.xlu0 %716
      %718 = vrot.lane.b32.xlu0 %v640, 16
      %v719 = vpop.permute.xlu0 %718
      %720 = vrot.lane.b32.xlu0 %v642, 16
      %v721 = vpop.permute.xlu0 %720
      %vm722 = vcmp.lt.s32.totalorder %v679, 16
      %v723 = vsel %vm722, %v715, %v719
      %v724 = vsel %vm722, %v717, %v721
      %v725 = vsel %vm722, %v719, %v715
      %v726 = vsel %vm722, %v721, %v717
      %728 = vset.pattern.permute.xlu0 0
      %729 = vperm.xlu0 %728, %v645
      %v730 = vpop.permute.xlu0 %729
      %733 = vset.pattern.permute.xlu0 0
      %734 = vperm.xlu0 %733, %v646
      %v735 = vpop.permute.xlu0 %734
      %v737 = vmul.f32 %v725, %v730
      %v738 = vmul.f32 %v723, %v730
      %v739 = vmul.f32 %v726, %v735
      %v740 = vmul.f32 %v724, %v735
      %v742 = vlaneseq
      %v743 = vshrl.u32 %v742, 7
      %v744 = vsub.s32 0, %v743
      %v745 = vrot.slane %v662, %v744
      %v746 = vlaneseq
      %v747 = vshrl.u32 %v746, 7
      %v748 = vsub.s32 1, %v747
      %v749 = vrot.slane %v662, %v748
      %v752 = vmul.f32 %v737, %v745
      %v753 = vmul.f32 %v738, %v749
      %v754 = vmul.f32 %v739, %v745
      %v755 = vmul.f32 %v740, %v749
      %v756 = vadd.f32 %v710, %v752
      %v757 = vadd.f32 %v711, %v753
      %v758 = vadd.f32 %v712, %v754
      %v759 = vadd.f32 %v713, %v755
      %760 = vrot.lane.b32.xlu0 %v639, 15
      %v761 = vpop.permute.xlu0 %760
      %762 = vrot.lane.b32.xlu0 %v641, 15
      %v763 = vpop.permute.xlu0 %762
      %764 = vrot.lane.b32.xlu0 %v640, 15
      %v765 = vpop.permute.xlu0 %764
      %766 = vrot.lane.b32.xlu0 %v642, 15
      %v767 = vpop.permute.xlu0 %766
      %vm768 = vcmp.lt.s32.totalorder %v679, 15
      %v769 = vsel %vm768, %v761, %v765
      %v770 = vsel %vm768, %v763, %v767
      %v771 = vsel %vm768, %v765, %v761
      %v772 = vsel %vm768, %v767, %v763
      %774 = vset.pattern.permute.xlu0 0
      %775 = vperm.xlu0 %774, %v647
      %v776 = vpop.permute.xlu0 %775
      %779 = vset.pattern.permute.xlu0 0
      %780 = vperm.xlu0 %779, %v648
      %v781 = vpop.permute.xlu0 %780
      %v783 = vmul.f32 %v771, %v776
      %v784 = vmul.f32 %v769, %v776
      %v785 = vmul.f32 %v772, %v781
      %v786 = vmul.f32 %v770, %v781
      %v788 = vlaneseq
      %v789 = vshrl.u32 %v788, 7
      %v790 = vsub.s32 0, %v789
      %v791 = vrot.slane %v663, %v790
      %v792 = vlaneseq
      %v793 = vshrl.u32 %v792, 7
      %v794 = vsub.s32 1, %v793
      %v795 = vrot.slane %v663, %v794
      %v798 = vmul.f32 %v783, %v791
      %v799 = vmul.f32 %v784, %v795
      %v800 = vmul.f32 %v785, %v791
      %v801 = vmul.f32 %v786, %v795
      %v802 = vadd.f32 %v756, %v798
      %v803 = vadd.f32 %v757, %v799
      %v804 = vadd.f32 %v758, %v800
      %v805 = vadd.f32 %v759, %v801
      %806 = vrot.lane.b32.xlu0 %v639, 1
      %v807 = vpop.permute.xlu0 %806
      %808 = vrot.lane.b32.xlu0 %v641, 1
      %v809 = vpop.permute.xlu0 %808
      %810 = vrot.lane.b32.xlu0 %v640, 1
      %v811 = vpop.permute.xlu0 %810
      %812 = vrot.lane.b32.xlu0 %v642, 1
      %v813 = vpop.permute.xlu0 %812
      %vm814 = vcmp.lt.s32.totalorder %v679, 1
      %v815 = vsel %vm814, %v807, %v811
      %v816 = vsel %vm814, %v809, %v813
      %v817 = vsel %vm814, %v811, %v807
      %v818 = vsel %vm814, %v813, %v809
      %820 = vset.pattern.permute.xlu0 0
      %821 = vperm.xlu0 %820, %v649
      %v822 = vpop.permute.xlu0 %821
      %825 = vset.pattern.permute.xlu0 0
      %826 = vperm.xlu0 %825, %v650
      %v827 = vpop.permute.xlu0 %826
      %v829 = vmul.f32 %v817, %v822
      %v830 = vmul.f32 %v815, %v822
      %v831 = vmul.f32 %v818, %v827
      %v832 = vmul.f32 %v816, %v827
      %v834 = vlaneseq
      %v835 = vshrl.u32 %v834, 7
      %v836 = vsub.s32 0, %v835
      %v837 = vrot.slane %v664, %v836
      %v838 = vlaneseq
      %v839 = vshrl.u32 %v838, 7
      %v840 = vsub.s32 1, %v839
      %v841 = vrot.slane %v664, %v840
      %v844 = vmul.f32 %v829, %v837
      %v845 = vmul.f32 %v830, %v841
      %v846 = vmul.f32 %v831, %v837
      %v847 = vmul.f32 %v832, %v841
      %v848 = vadd.f32 %v802, %v844
      %v849 = vadd.f32 %v803, %v845
      %v850 = vadd.f32 %v804, %v846
      %v851 = vadd.f32 %v805, %v847
      %853 = vset.pattern.permute.xlu0 0
      %854 = vperm.xlu0 %853, %v651
      %v855 = vpop.permute.xlu0 %854
      %858 = vset.pattern.permute.xlu0 0
      %859 = vperm.xlu0 %858, %v652
      %v860 = vpop.permute.xlu0 %859
      %v862 = vmul.f32 %v639, %v855
      %v863 = vmul.f32 %v640, %v855
      %v864 = vmul.f32 %v641, %v860
      %v865 = vmul.f32 %v642, %v860
      %v867 = vlaneseq
      %v868 = vshrl.u32 %v867, 7
      %v869 = vsub.s32 0, %v868
      %v870 = vrot.slane %v665, %v869
      %v871 = vlaneseq
      %v872 = vshrl.u32 %v871, 7
      %v873 = vsub.s32 1, %v872
      %v874 = vrot.slane %v665, %v873
      %v877 = vmul.f32 %v862, %v870
      %v878 = vmul.f32 %v863, %v874
      %v879 = vmul.f32 %v864, %v870
      %v880 = vmul.f32 %v865, %v874
      %v881 = vadd.f32 %v848, %v877
      %v882 = vadd.f32 %v849, %v878
      %v883 = vadd.f32 %v850, %v879
      %v884 = vadd.f32 %v851, %v880
      %885 = vrot.lane.b32.xlu0 %v639, 127
      %v886 = vpop.permute.xlu0 %885
      %887 = vrot.lane.b32.xlu0 %v641, 127
      %v888 = vpop.permute.xlu0 %887
      %889 = vrot.lane.b32.xlu0 %v640, 127
      %v890 = vpop.permute.xlu0 %889
      %891 = vrot.lane.b32.xlu0 %v642, 127
      %v892 = vpop.permute.xlu0 %891
      %vm893 = vcmp.lt.s32.totalorder %v679, 127
      %v894 = vsel %vm893, %v886, %v890
      %v895 = vsel %vm893, %v888, %v892
      %v896 = vsel %vm893, %v890, %v886
      %v897 = vsel %vm893, %v892, %v888
      %899 = vset.pattern.permute.xlu0 0
      %900 = vperm.xlu0 %899, %v653
      %v901 = vpop.permute.xlu0 %900
      %904 = vset.pattern.permute.xlu0 0
      %905 = vperm.xlu0 %904, %v654
      %v906 = vpop.permute.xlu0 %905
      %v908 = vmul.f32 %v894, %v901
      %v909 = vmul.f32 %v896, %v901
      %v910 = vmul.f32 %v895, %v906
      %v911 = vmul.f32 %v897, %v906
      %v913 = vlaneseq
      %v914 = vshrl.u32 %v913, 7
      %v915 = vsub.s32 0, %v914
      %v916 = vrot.slane %v666, %v915
      %v917 = vlaneseq
      %v918 = vshrl.u32 %v917, 7
      %v919 = vsub.s32 1, %v918
      %v920 = vrot.slane %v666, %v919
      %v923 = vmul.f32 %v908, %v916
      %v924 = vmul.f32 %v909, %v920
      %v925 = vmul.f32 %v910, %v916
      %v926 = vmul.f32 %v911, %v920
      %v927 = vadd.f32 %v881, %v923
      %v928 = vadd.f32 %v882, %v924
      %v929 = vadd.f32 %v883, %v925
      %v930 = vadd.f32 %v884, %v926
      %931 = vrot.lane.b32.xlu0 %v639, 113
      %v932 = vpop.permute.xlu0 %931
      %933 = vrot.lane.b32.xlu0 %v641, 113
      %v934 = vpop.permute.xlu0 %933
      %935 = vrot.lane.b32.xlu0 %v640, 113
      %v936 = vpop.permute.xlu0 %935
      %937 = vrot.lane.b32.xlu0 %v642, 113
      %v938 = vpop.permute.xlu0 %937
      %vm939 = vcmp.lt.s32.totalorder %v679, 113
      %v940 = vsel %vm939, %v932, %v936
      %v941 = vsel %vm939, %v934, %v938
      %v942 = vsel %vm939, %v936, %v932
      %v943 = vsel %vm939, %v938, %v934
      %945 = vset.pattern.permute.xlu0 0
      %946 = vperm.xlu0 %945, %v655
      %v947 = vpop.permute.xlu0 %946
      %950 = vset.pattern.permute.xlu0 0
      %951 = vperm.xlu0 %950, %v656
      %v952 = vpop.permute.xlu0 %951
      %v954 = vmul.f32 %v940, %v947
      %v955 = vmul.f32 %v942, %v947
      %v956 = vmul.f32 %v941, %v952
      %v957 = vmul.f32 %v943, %v952
      %v959 = vlaneseq
      %v960 = vshrl.u32 %v959, 7
      %v961 = vsub.s32 0, %v960
      %v962 = vrot.slane %v667, %v961
      %v963 = vlaneseq
      %v964 = vshrl.u32 %v963, 7
      %v965 = vsub.s32 1, %v964
      %v966 = vrot.slane %v667, %v965
      %v969 = vmul.f32 %v954, %v962
      %v970 = vmul.f32 %v955, %v966
      %v971 = vmul.f32 %v956, %v962
      %v972 = vmul.f32 %v957, %v966
      %v973 = vadd.f32 %v927, %v969
      %v974 = vadd.f32 %v928, %v970
      %v975 = vadd.f32 %v929, %v971
      %v976 = vadd.f32 %v930, %v972
      %977 = vrot.lane.b32.xlu0 %v639, 112
      %v978 = vpop.permute.xlu0 %977
      %979 = vrot.lane.b32.xlu0 %v641, 112
      %v980 = vpop.permute.xlu0 %979
      %981 = vrot.lane.b32.xlu0 %v640, 112
      %v982 = vpop.permute.xlu0 %981
      %983 = vrot.lane.b32.xlu0 %v642, 112
      %v984 = vpop.permute.xlu0 %983
      %vm985 = vcmp.lt.s32.totalorder %v679, 112
      %v986 = vsel %vm985, %v978, %v982
      %v987 = vsel %vm985, %v980, %v984
      %v988 = vsel %vm985, %v982, %v978
      %v989 = vsel %vm985, %v984, %v980
      %991 = vset.pattern.permute.xlu0 0
      %992 = vperm.xlu0 %991, %v657
      %v993 = vpop.permute.xlu0 %992
      %996 = vset.pattern.permute.xlu0 0
      %997 = vperm.xlu0 %996, %v658
      %v998 = vpop.permute.xlu0 %997
      %v1000 = vmul.f32 %v986, %v993
      %v1001 = vmul.f32 %v988, %v993
      %v1002 = vmul.f32 %v987, %v998
      %v1003 = vmul.f32 %v989, %v998
      %v1005 = vlaneseq
      %v1006 = vshrl.u32 %v1005, 7
      %v1007 = vsub.s32 0, %v1006
      %v1008 = vrot.slane %v668, %v1007
      %v1009 = vlaneseq
      %v1010 = vshrl.u32 %v1009, 7
      %v1011 = vsub.s32 1, %v1010
      %v1012 = vrot.slane %v668, %v1011
      %v1015 = vmul.f32 %v1000, %v1008
      %v1016 = vmul.f32 %v1001, %v1012
      %v1017 = vmul.f32 %v1002, %v1008
      %v1018 = vmul.f32 %v1003, %v1012
      %v1019 = vadd.f32 %v973, %v1015
      %v1020 = vadd.f32 %v974, %v1016
      %v1021 = vadd.f32 %v975, %v1017
      %v1022 = vadd.f32 %v976, %v1018
      %1023 = vrot.lane.b32.xlu0 %v639, 111
      %v1024 = vpop.permute.xlu0 %1023
      %1025 = vrot.lane.b32.xlu0 %v641, 111
      %v1026 = vpop.permute.xlu0 %1025
      %1027 = vrot.lane.b32.xlu0 %v640, 111
      %v1028 = vpop.permute.xlu0 %1027
      %1029 = vrot.lane.b32.xlu0 %v642, 111
      %v1030 = vpop.permute.xlu0 %1029
      %vm1031 = vcmp.lt.s32.totalorder %v679, 111
      %v1032 = vsel %vm1031, %v1024, %v1028
      %v1033 = vsel %vm1031, %v1026, %v1030
      %v1034 = vsel %vm1031, %v1028, %v1024
      %v1035 = vsel %vm1031, %v1030, %v1026
      %1037 = vset.pattern.permute.xlu0 0
      %1038 = vperm.xlu0 %1037, %v659
      %v1039 = vpop.permute.xlu0 %1038
      %1042 = vset.pattern.permute.xlu0 0
      %1043 = vperm.xlu0 %1042, %v660
      %v1044 = vpop.permute.xlu0 %1043
      %v1046 = vmul.f32 %v1032, %v1039
      %v1047 = vmul.f32 %v1034, %v1039
      %v1048 = vmul.f32 %v1033, %v1044
      %v1049 = vmul.f32 %v1035, %v1044
      %v1051 = vlaneseq
      %v1052 = vshrl.u32 %v1051, 7
      %v1053 = vsub.s32 0, %v1052
      %v1054 = vrot.slane %v669, %v1053
      %v1055 = vlaneseq
      %v1056 = vshrl.u32 %v1055, 7
      %v1057 = vsub.s32 1, %v1056
      %v1058 = vrot.slane %v669, %v1057
      %v1061 = vmul.f32 %v1046, %v1054
      %v1062 = vmul.f32 %v1047, %v1058
      %v1063 = vmul.f32 %v1048, %v1054
      %v1064 = vmul.f32 %v1049, %v1058
      %v1065 = vadd.f32 %v1019, %v1061
      %v1066 = vadd.f32 %v1020, %v1062
      %v1067 = vadd.f32 %v1021, %v1063
      %v1068 = vadd.f32 %v1022, %v1064
      %v1069 = vld [vmem:[%s6] sm:$0xff]
      %v1070 = vld [vmem:[%s6 + $0x8] sm:$0xff]
      %1072 = vset.pattern.permute.xlu0 0
      %1073 = vperm.xlu0 %1072, %v1069
      %v1074 = vpop.permute.xlu0 %1073
      %1077 = vset.pattern.permute.xlu0 0
      %1078 = vperm.xlu0 %1077, %v1070
      %v1079 = vpop.permute.xlu0 %1078
      %v1081 = vmul.f32 %v1065, %v1074
      %v1082 = vmul.f32 %v1066, %v1074
      %v1083 = vmul.f32 %v1067, %v1079
      %v1084 = vmul.f32 %v1068, %v1079
      %v1085 = vld [vmem:[%s7] sm:$0xff]
      %v1086 = vld [vmem:[%s7 + $0x8] sm:$0xff]
      %1088 = vset.pattern.permute.xlu0 0
      %1089 = vperm.xlu0 %1088, %v1085
      %v1090 = vpop.permute.xlu0 %1089
      %1093 = vset.pattern.permute.xlu0 0
      %1094 = vperm.xlu0 %1093, %v1086
      %v1095 = vpop.permute.xlu0 %1094
      %v1097 = vadd.f32 %v1081, %v1090
      %v1098 = vadd.f32 %v1082, %v1090
      %v1099 = vadd.f32 %v1083, %v1095
      %v1100 = vadd.f32 %v1084, %v1095
      %v1101 = vxor.u32 %v1097, 2147483648
      %v1102 = vxor.u32 %v1098, 2147483648
      %v1103 = vxor.u32 %v1099, 2147483648
      %v1104 = vxor.u32 %v1100, 2147483648
      %v1105 = vmul.f32 %v1101, 1.442695
      %v1106 = vpow.pop %v1105
      %v1107 = vmul.f32 %v1102, 1.442695
      %v1108 = vpow.pop %v1107
      %v1109 = vmul.f32 %v1103, 1.442695
      %v1110 = vpow.pop %v1109
      %v1111 = vmul.f32 %v1104, 1.442695
      %v1112 = vpow.pop %v1111
      %v1113 = vadd.f32 %v1106, 1.0
      %v1114 = vadd.f32 %v1108, 1.0
      %v1115 = vadd.f32 %v1110, 1.0
      %v1116 = vadd.f32 %v1112, 1.0
      %v1117 = vrcp.pop %v1113
      %v1118 = vmul.f32 1.0, %v1117
      %v1119 = vrcp.pop %v1114
      %v1120 = vmul.f32 1.0, %v1119
      %v1121 = vrcp.pop %v1115
      %v1122 = vmul.f32 1.0, %v1121
      %v1123 = vrcp.pop %v1116
      %v1124 = vmul.f32 1.0, %v1123
      %v1125 = vmul.f32 %v1097, %v1118
      %v1126 = vmul.f32 %v1098, %v1120
      %v1127 = vmul.f32 %v1099, %v1122
      %v1128 = vmul.f32 %v1100, %v1124
      %v1129 = vadd.f32 %v1125, %v1126
      %1130 = vadd.xlane.f32.xlu0 %v1129
      %v1131 = vpop.xlane.xlu0 %1130
      %v1132 = vadd.f32 %v1127, %v1128
      %1133 = vadd.xlane.f32.xlu0 %v1132
      %v1134 = vpop.xlane.xlu0 %1133
      %v1135 = vmul.f32 %v1131, 0.00390625
      %v1136 = vmul.f32 %v1134, 0.00390625
      %v1137 = vld [vmem:[%s8] sm:$0xff]
      %v1138 = vld [vmem:[%s8 + $0x8] sm:$0xff]
      %v1139 = vmul.f32 %v1137, %v1135
      %v1140 = vmul.f32 %v1138, %v1136
      %vm1141 = vcmask 15360
      %v1142 = vsel %vm1141, %v1139, 0.0
      %v1143 = vsel %vm1141, %v1140, 0.0
      %v1144 = vadd.f32 %v1142, %v1143
      %v1145 = vrot.slane %v1144, 4
      %v1146 = vadd.f32 %v1144, %v1145
      %v1147 = vrot.slane %v1146, 2
      %v1148 = vadd.f32 %v1146, %v1147
      %v1149 = vrot.slane %v1148, 1
      %v1150 = vadd.f32 %v1148, %v1149
      %v1151 = vld [vmem:[%s9] sm:$0x1]
      %v1152 = vadd.f32 %v1150, %v1151
      %v1153 = vxor.u32 %v1152, 2147483648
      %v1154 = vmul.f32 %v1153, 1.442695
      %v1155 = vpow.pop %v1154
      %v1156 = vadd.f32 %v1155, 1.0
      %v1157 = vrcp.pop %v1156
      %v1158 = vmul.f32 1.0, %v1157
      %v1159 = vmul.f32 %v1152, %v1158
      %v1160 = vld [vmem:[%s10] sm:$0xff]
      %v1161 = vld [vmem:[%s10 + $0x8] sm:$0xff]
      %v1162 = vlaneseq
      %v1163 = vshrl.u32 %v1162, 7
      %v1164 = vsub.s32 0, %v1163
      %v1165 = vrot.slane %v1159, %v1164
      %v1166 = vmul.f32 %v1160, %v1165
      %v1167 = vmul.f32 %v1161, %v1165
      %v1168 = vsel %vm1141, %v1166, 0.0
      %1169 = vadd.xlane.f32.xlu0 %v1168
      %v1170 = vpop.xlane.xlu0 %1169
      %v1171 = vsel %vm1141, %v1167, 0.0
      %1172 = vadd.xlane.f32.xlu0 %v1171
      %v1173 = vpop.xlane.xlu0 %1172
      %v1174 = vld [vmem:[%s11] sm:$0xff]
      %v1175 = vld [vmem:[%s11 + $0x8] sm:$0xff]
      %v1176 = vadd.f32 %v1170, %v1174
      %v1177 = vadd.f32 %v1173, %v1175
      %v1178 = vxor.u32 %v1176, 2147483648
      %v1179 = vxor.u32 %v1177, 2147483648
      %v1180 = vmul.f32 %v1178, 1.442695
      %v1181 = vpow.pop %v1180
      %v1182 = vmul.f32 %v1179, 1.442695
      %v1183 = vpow.pop %v1182
      %v1184 = vadd.f32 %v1181, 1.0
      %v1185 = vadd.f32 %v1183, 1.0
      %v1186 = vrcp.pop %v1184
      %v1187 = vmul.f32 1.0, %v1186
      %v1188 = vrcp.pop %v1185
      %v1189 = vmul.f32 1.0, %v1188
      %1191 = vset.pattern.permute.xlu0 0
      %1192 = vperm.xlu0 %1191, %v1187
      %v1193 = vpop.permute.xlu0 %1192
      %1196 = vset.pattern.permute.xlu0 0
      %1197 = vperm.xlu0 %1196, %v1189
      %v1198 = vpop.permute.xlu0 %1197
      %v1200 = vmul.f32 %v1125, %v1193
      %v1201 = vmul.f32 %v1126, %v1193
      %v1202 = vmul.f32 %v1127, %v1198
      %v1203 = vmul.f32 %v1128, %v1198
      %v1204 = vld [vmem:[%s12] sm:$0xff]
      %vm1205 = vcmask 130048
      %v1207 = vsel %vm1205, %v1204, 0
      %1209 = vmatprep.subr.mxu0 %v1201
      %1210 = vmatpush1.msra.mxu0 %v1200
      %1211 = vmatprep.subr.mxu0 %v1203
      %1212 = vmatpush1.msra.mxu0 %v1202
      %1213 = vmatprep.subr.mxu0 0.0
      %1214 = vmatpush1.msra.mxu0 0.0
      %1215 = vmatprep.subr.mxu0 0.0
      %1216 = vmatpush1.msra.mxu0 0.0
      %1217 = vmatprep.subr.mxu0 0.0
      %1218 = vmatpush1.msra.mxu0 0.0
      %1219 = vmatprep.subr.mxu0 0.0
      %1220 = vmatpush1.msra.mxu0 0.0
      %1221 = vmatprep.subr.mxu0 0.0
      %1222 = vmatpush1.msra.mxu0 0.0
      %1223 = vmatprep.subr.mxu0 0.0
      %1224 = vmatpush1.msra.mxu0 0.0
      %1225 = vmatprep.subr.mxu0 0.0
      %1226 = vmatpush1.msra.mxu0 0.0
      %1227 = vmatprep.subr.mxu0 0.0
      %1228 = vmatpush1.msra.mxu0 0.0
      %1229 = vmatprep.subr.mxu0 0.0
      %1230 = vmatpush1.msra.mxu0 0.0
      %1231 = vmatprep.subr.mxu0 0.0
      %1232 = vmatpush1.msra.mxu0 0.0
      %1233 = vmatprep.subr.mxu0 0.0
      %1234 = vmatpush1.msra.mxu0 0.0
      %1235 = vmatprep.subr.mxu0 0.0
      %1236 = vmatpush1.msra.mxu0 0.0
      %1237 = vmatprep.subr.mxu0 0.0
      %1238 = vmatpush1.msra.mxu0 0.0
      %1239 = vmatprep.subr.mxu0 0.0
      %1240 = vmatpush1.msra.mxu0 0.0
      %1241 = vmatprep.subr.mxu0 0.0
      %1242 = vmatpush1.msra.mxu0 0.0
      %1243 = vmatprep.subr.mxu0 0.0
      %1244 = vmatpush1.msra.mxu0 0.0
      %1245 = vmatprep.subr.mxu0 0.0
      %1246 = vmatpush1.msra.mxu0 0.0
      %1247 = vmatprep.subr.mxu0 0.0
      %1248 = vmatpush1.msra.mxu0 0.0
      %1249 = vmatprep.subr.mxu0 0.0
      %1250 = vmatpush1.msra.mxu0 0.0
      %1251 = vmatprep.subr.mxu0 0.0
      %1252 = vmatpush1.msra.mxu0 0.0
      %1253 = vmatprep.subr.mxu0 0.0
      %1254 = vmatpush1.msra.mxu0 0.0
      %1255 = vmatprep.subr.mxu0 0.0
      %1256 = vmatpush1.msra.mxu0 0.0
      %1257 = vmatprep.subr.mxu0 0.0
      %1258 = vmatpush1.msra.mxu0 0.0
      %1259 = vmatprep.subr.mxu0 0.0
      %1260 = vmatpush1.msra.mxu0 0.0
      %1261 = vmatprep.subr.mxu0 0.0
      %1262 = vmatpush1.msra.mxu0 0.0
      %1263 = vmatprep.subr.mxu0 0.0
      %1264 = vmatpush1.msra.mxu0 0.0
      %1265 = vmatprep.subr.mxu0 0.0
      %1266 = vmatpush1.msra.mxu0 0.0
      %1267 = vmatprep.subr.mxu0 0.0
      %1268 = vmatpush1.msra.mxu0 0.0
      %1269 = vmatprep.subr.mxu0 0.0
      %1270 = vmatpush1.msra.mxu0 0.0
      %1271 = vmatprep.subr.mxu0 0.0
      %1272 = vmatpush1.msra.mxu0 0.0
      %1273 = vmatprep.mubr.f32.mxu0 0.0
      %1274 = vmatmul.mubr.f32.gmra.mrb[0].mxu0 %v1207
      %v1275 = vpop.f32.mrb[0].mxu0
      %v1276 = vadd.f32 0.0, %v1275
      %v1277 = vpop.f32.mrb[0].mxu0
      %v1278 = vadd.f32 0.0, %v1277
      %1279 = vdwg.mxu0
      %v1280 = vld [vmem:[%s13] sm:$0xff]
      %1282 = vset.pattern.permute.xlu0 0
      %1283 = vperm.xlu0 %1282, %v1280
      %v1284 = vpop.permute.xlu0 %1283
      %v1286 = vmul.f32 %v1276, %v1284
      %v1287 = vmul.f32 %v1278, %v1284
      %v1288 = vld [vmem:[%s14] sm:$0xff]
      %1290 = vset.pattern.permute.xlu0 0
      %1291 = vperm.xlu0 %1290, %v1288
      %v1292 = vpop.permute.xlu0 %1291
      %v1294 = vadd.f32 %v1286, %v1292
      %v1295 = vadd.f32 %v1287, %v1292
      %v1296 = vadd.f32 %v1294, %v495
      %v1297 = vadd.f32 %v1295, %v496
      %1298 = vst [vmem:[%s494] sm:$0xff] %v1296
      %1299 = vst [vmem:[%s494 + $0x8] sm:$0xff] %v1297
      %p1300 = scmp.lt.s32.totalorder %s26, 1
      %s1301 = scalar_select %p1300, %s26, 1
      %s1302 = smul.addr %s1301, 2
      %s1303 = smul.addr %s1302, 8
      %s1304 = scalar_lea.vmem %s15, %s1303
      // Predicated region
      $region81: #{mbblock_forward.2} parent=79 // pred_check
        %p1305 = pneg %p364
      $region82: #{mbblock_forward.2} parent=79 // pred_check_branch
        %1307 = sbr.rel (%p1305) target = $region84
      $region83: #{mbblock_forward.2} parent=79 // pred_region
        _
      $region84: #{mbblock_forward.2} parent=79 // pred_fallthru
        _
    $region80: #{mbblock_forward.2} parent=5 // pred_fallthru
      _
    %p1308 = scmp.le.s32.totalorder 2, %s21
    // Predicated region
    $region85: #{mbblock_forward.2} parent=5 // pred_check
      %p1309 = pneg %p1308
    $region86: #{mbblock_forward.2} parent=5 // pred_check_branch
      %1311 = sbr.rel (%p1309) target = $region88
    $region87: #{mbblock_forward.2} parent=5 // pred_region
      %s1312 = ssub.s32 %s21, 2
      // Predicated region
      $region89: #{mbblock_forward.2} parent=87 // pred_check
        %p1313 = pneg %p370
      $region90: #{mbblock_forward.2} parent=87 // pred_check_branch
        %1315 = sbr.rel (%p1313) target = $region92
      $region91: #{mbblock_forward.2} parent=87 // pred_region
        %p1316 = scmp.lt.s32.totalorder %s27, 1
        %s1317 = scalar_select %p1316, %s27, 1
        %s1318 = smul.addr %s1317, 2
        %s1319 = smul.addr %s1318, 8
        %s1320 = scalar_lea.vmem %s15, %s1319
      $region92: #{mbblock_forward.2} parent=87 // pred_fallthru
        _
    $region88: #{mbblock_forward.2} parent=5 // pred_fallthru
      _
  $region6: #{mbblock_forward.2} parent=0 // loop_footer
    %s25 = sadd.s32 1, %s21
  $region7: #{mbblock_forward.2} parent=0 // loop_footer_branch
    %20 = sbr.rel target = $region3
  $region8: #{mbblock_forward.2} parent=0 // loop_exit
    _

</llo_original>
